<compile_context>
chip_gen: v7x
topology: tpu7x:2x2x1
jax: 0.10.0
libtpu: 0.0.40
codegen_flags: <defaults>
</compile_context>

<pallas_src>
import functools

import jax
import jax.numpy as jnp
from jax.experimental import pallas as pl
from jax.experimental.pallas import tpu as pltpu

LAYER_SIZES = [2, 256, 512, 256, 1]
BIAS_HIDDEN = 512


def _round_up(x, m):
    return ((x + m - 1) // m) * m


def _device_kind():
    try:
        return jax.devices()[0].device_kind.lower()
    except Exception:
        return ""


def _tensorcores_per_chip():
    """v7x exposes 2 TensorCores a 'parallel' grid axis can shard across;
    earlier parts expose one, where splitting a single-tile batch only adds a
    pipeline step."""
    kind = _device_kind()
    return 2 if ("v7" in kind or "7x" in kind) else 1


def _eup_supports_bf16():
    """bf16 transcendentals: v6e/v7x yes, v2-v5 no."""
    kind = _device_kind()
    if any(tag in kind for tag in ("v2", "v3", "v4", "v5")):
        return False
    return True


def delu_kernel(x_ref,
                w0_ref, b0_ref,
                w1_ref, b1_ref,
                w2_ref, b2_ref,
                w3r_ref,
                wb1_ref, bb1_ref,
                wb2r_ref, bb2_ref,
                out_ref,
                *, acts_dtype, tanh_dtype):
    """Fused DeLU forward for one batch tile (everything stays in VMEM)."""
    x = x_ref[...]                                           # (tm, 2) f32

    # ---- layer 0 (K=2): VPU broadcast-FMAs instead of a ~1%-utilized MXU pass.
    w0 = w0_ref[...]                                         # (2, 256) f32
    h = x[:, 0:1] * w0[0:1, :] + x[:, 1:2] * w0[1:2, :] + b0_ref[...]
    # ReLU fused with the MXU-operand cast: this tensor only feeds layer 1,
    # so no f32 copy needs to stay live.
    h = jnp.maximum(h, 0.0).astype(acts_dtype)               # (tm, 256)

    # ---- layer 1: 256 -> 512 on the MXU (narrow operands, f32 accumulate).
    h = jnp.dot(h, w1_ref[...], preferred_element_type=jnp.float32) + b1_ref[...]
    h = jnp.maximum(h, 0.0).astype(acts_dtype)               # (tm, 512), feeds layer 2 only

    # ---- layer 2: 512 -> 256 on the MXU; keep f32 (feeds head + R).
    h = jnp.dot(h, w2_ref[...], preferred_element_type=jnp.float32) + b2_ref[...]
    h = jnp.maximum(h, 0.0)                                  # (tm, 256) f32

    # ---- Fcl_Net head (out width 1): VPU multiply + lane reduction, no MXU.
    h1 = jnp.sum(h * w3r_ref[...], axis=-1, keepdims=True)   # (tm, 1) f32

    # ---- R = 1[h > 0]; post-ReLU > 0 == pre-activation > 0 (matches torch).
    #      Exact in bf16.  h is dead after this point.
    r = (h > 0.0).astype(acts_dtype)                         # (tm, 256)

    # ---- Bias_Net hidden: 256 -> 512 on the MXU (r cast is lossless).
    hb = jnp.dot(r, wb1_ref[...],
                 preferred_element_type=jnp.float32) + bb1_ref[...]
    # tanh on the EUP; bf16 on v6e/v7x (2x throughput), f32 on v5e.
    hb = jnp.tanh(hb.astype(tanh_dtype))                     # (tm, 512)

    # ---- Bias_Net head (out width 1): VPU multiply + lane reduction.
    #      (hb * f32 row promotes to f32, so the sum accumulates in f32.)
    h2 = jnp.sum(hb * wb2r_ref[...], axis=-1, keepdims=True) + bb2_ref[...]

    out_ref[...] = (h1 + h2).astype(out_ref.dtype)


def delu_forward(x, params, *, tile_m=4096, use_bf16_matmul=True,
                 use_bf16_tanh=None):
    """x: (N, 2) float32. params: dict of transposed weights / row biases."""
    n, f_in = x.shape
    assert f_in == LAYER_SIZES[0]
    acts_dtype = jnp.bfloat16 if use_bf16_matmul else jnp.float32
    if use_bf16_tanh is None:
        use_bf16_tanh = bool(use_bf16_matmul) and _eup_supports_bf16()
    tanh_dtype = jnp.bfloat16 if use_bf16_tanh else jnp.float32

    # --- batch tiling: bounded tile, multiple of 8 sublanes; force >=2 tiles
    #     only on multi-TensorCore parts (v7x) so the parallel grid axis can
    #     shard across cores; ragged N handled by zero-padding.
    n8 = _round_up(n, 8)
    tm = min(_round_up(tile_m, 8), n8)
    if _tensorcores_per_chip() >= 2 and n8 // tm < 2 and n8 >= 16:
        tm = _round_up((n8 + 1) // 2, 8)
    n_pad = _round_up(n, tm)
    if n_pad != n:
        x = jnp.pad(x, ((0, n_pad - n), (0, 0)))
    grid = n_pad // tm

    # Parameters reshaped for the kernel: wide matmul weights in the MXU operand
    # dtype; width-1 head weights pre-transposed to lane-dense (1, K) rows.
    param_list = [
        params["w0"], params["b0"],
        params["w1"].astype(acts_dtype), params["b1"],
        params["w2"].astype(acts_dtype), params["b2"],
        params["w3"].T,
        params["wb1"].astype(acts_dtype), params["bb1"],
        params["wb2"].T, params["bb2"],
    ]
    param_bytes = sum(int(p.size) * p.dtype.itemsize for p in param_list)

    in_specs = [pl.BlockSpec((tm, f_in), lambda i: (i, 0))]
    # Weights/biases: block == full array, constant index map across the grid,
    # so they stay resident in VMEM (no per-tile re-DMA).
    in_specs += [pl.BlockSpec(p.shape, lambda i: (0, 0)) for p in param_list]
    out_spec = pl.BlockSpec((tm, LAYER_SIZES[-1]), lambda i: (i, 0))

    flops_per_row = 2 * (LAYER_SIZES[1] * LAYER_SIZES[2]       # layer 1 (MXU)
                         + LAYER_SIZES[2] * LAYER_SIZES[3]     # layer 2 (MXU)
                         + LAYER_SIZES[3] * BIAS_HIDDEN        # bias hidden (MXU)
                         + LAYER_SIZES[0] * LAYER_SIZES[1]     # layer 0 (VPU)
                         + LAYER_SIZES[3] + BIAS_HIDDEN)       # head reductions
    cost = pl.CostEstimate(
        flops=int(flops_per_row) * int(n_pad),
        transcendentals=int(n_pad) * BIAS_HIDDEN,              # tanh
        bytes_accessed=int(n_pad) * (f_in + 1) * 4 + param_bytes,
    )

    # Right-size the scoped-VMEM limit from the chosen tile (upper bound on the
    # per-row activation footprint, 2x headroom), instead of a fixed 48 MiB:
    # keeps us well inside v7x's 64 MiB while scaling with tile_m.
    act_itemsize = 2 if use_bf16_matmul else 4
    bytes_per_row = (
        LAYER_SIZES[1] * (4 + act_itemsize)      # layer-0 activation (+ cast)
        + LAYER_SIZES[2] * (4 + act_itemsize)    # layer-1 activation (+ cast)
        + LAYER_SIZES[3] * (4 + act_itemsize)    # layer-2 activation + r
        + BIAS_HIDDEN * (4 + 4)                  # bias hidden pre/post tanh
    )
    vmem_limit = int(min(56 << 20,
                         max(32 << 20, 2 * (tm * bytes_per_row + param_bytes))))

    out = pl.pallas_call(
        functools.partial(delu_kernel, acts_dtype=acts_dtype,
                          tanh_dtype=tanh_dtype),
        out_shape=jax.ShapeDtypeStruct((n_pad, LAYER_SIZES[-1]), jnp.float32),
        grid_spec=pltpu.PrefetchScalarGridSpec(
            num_scalar_prefetch=0,
            grid=(grid,),
            in_specs=in_specs,
            out_specs=out_spec,
        ),
        compiler_params=pltpu.CompilerParams(
            dimension_semantics=("parallel",),
            vmem_limit_bytes=vmem_limit,
        ),
        cost_estimate=cost,
    )(x, *param_list)
    return out[:n]


def init_params(key):
    """Deterministic parameter init (xavier-normal weights, zero biases).

    Weights are stored as (in_features, out_features), i.e. transposed relative
    to torch.nn.Linear.weight, so y = x @ W + b.
    """
    def xavier(key, fan_in, fan_out):
        std = (2.0 / (fan_in + fan_out)) ** 0.5
        return std * jax.random.normal(key, (fan_in, fan_out), jnp.float32)

    ks = jax.random.split(key, 6)
    ls = LAYER_SIZES
    params = {
        # Fcl_Net
        "w0": xavier(ks[0], ls[0], ls[1]), "b0": jnp.zeros((1, ls[1]), jnp.float32),
        "w1": xavier(ks[1], ls[1], ls[2]), "b1": jnp.zeros((1, ls[2]), jnp.float32),
        "w2": xavier(ks[2], ls[2], ls[3]), "b2": jnp.zeros((1, ls[3]), jnp.float32),
        "w3": xavier(ks[3], ls[3], ls[4]),                      # last layer, no bias
        # Bias_Net (hidden width 512)
        "wb1": xavier(ks[4], ls[3], BIAS_HIDDEN), "bb1": jnp.zeros((1, BIAS_HIDDEN), jnp.float32),
        "wb2": xavier(ks[5], BIAS_HIDDEN, ls[4]), "bb2": jnp.zeros((1, ls[4]), jnp.float32),
    }
    return params


def delu_reference(x, p, acts_dtype=jnp.float32, tanh_dtype=jnp.float32):
    """Pure-JAX forward.  With f32 dtypes this is exactly the module's math;
    with bf16 dtypes it mirrors the kernel's MXU-operand / tanh casts."""
    ad = acts_dtype
    hp = jax.lax.Precision.HIGHEST
    w0 = p["w0"]
    h = x[:, 0:1] * w0[0:1, :] + x[:, 1:2] * w0[1:2, :] + p["b0"]
    h = jnp.maximum(h, 0.0)
    h = jnp.dot(h.astype(ad), p["w1"].astype(ad),
                preferred_element_type=jnp.float32, precision=hp) + p["b1"]
    h = jnp.maximum(h, 0.0)
    h = jnp.dot(h.astype(ad), p["w2"].astype(ad),
                preferred_element_type=jnp.float32, precision=hp) + p["b2"]
    h = jnp.maximum(h, 0.0)
    h1 = jnp.sum(h * p["w3"].T, axis=-1, keepdims=True)
    r = (h > 0.0).astype(ad)
    hb = jnp.dot(r, p["wb1"].astype(ad),
                 preferred_element_type=jnp.float32, precision=hp) + p["bb1"]
    hb = jnp.tanh(hb.astype(tanh_dtype))
    h2 = jnp.sum(hb * p["wb2"].T, axis=-1, keepdims=True) + p["bb2"]
    return h1 + h2


if __name__ == "__main__":
    key = jax.random.PRNGKey(0)
    pkey, xkey = jax.random.split(key)

    params = init_params(pkey)

    # Small deterministic input: batch of 8 points with 2 features each.
    x = jax.random.normal(xkey, (8, 2), jnp.float32)

    # Default path: bf16 MXU operands, f32 accumulation, auto tanh dtype.
    out = jax.block_until_ready(delu_forward(x, params))
    assert out.shape == (8, 1)
    tanh_dt = jnp.bfloat16 if _eup_supports_bf16() else jnp.float32
    ref = delu_reference(x, params, acts_dtype=jnp.bfloat16, tanh_dtype=tanh_dt)
    assert jnp.allclose(out, ref, atol=5e-3, rtol=5e-3), (out, ref)

    # Exact-f32 path validated separately against the module's exact math.
    out32 = jax.block_until_ready(
        delu_forward(x, params, use_bf16_matmul=False, use_bf16_tanh=False))
    ref32 = delu_reference(x, params)
    assert jnp.allclose(out32, ref32, atol=1e-4, rtol=1e-4), (out32, ref32)

    print("KERNEL_OK")
</pallas_src>

<mosaic_0001>
module attributes {stable_mosaic.version = 11 : i64} {
  func.func @delu_kernel(%arg0: i32, %arg1: memref<8x2xf32, #tpu.memory_space<vmem>>, %arg2: memref<2x256xf32, #tpu.memory_space<vmem>>, %arg3: memref<1x256xf32, #tpu.memory_space<vmem>>, %arg4: memref<256x512xbf16, #tpu.memory_space<vmem>>, %arg5: memref<1x512xf32, #tpu.memory_space<vmem>>, %arg6: memref<512x256xbf16, #tpu.memory_space<vmem>>, %arg7: memref<1x256xf32, #tpu.memory_space<vmem>>, %arg8: memref<1x256xf32, #tpu.memory_space<vmem>>, %arg9: memref<256x512xbf16, #tpu.memory_space<vmem>>, %arg10: memref<1x512xf32, #tpu.memory_space<vmem>>, %arg11: memref<1x512xf32, #tpu.memory_space<vmem>>, %arg12: memref<1x1xf32, #tpu.memory_space<vmem>>, %arg13: memref<8x1xf32, #tpu.memory_space<vmem>>) attributes {dimension_semantics = [#tpu.dimension_semantics<parallel>], iteration_bounds = array<i64: 1>, scalar_prefetch = 0 : i64, scratch_operands = 0 : i64, tpu.core_type = #tpu.core_type<tc>, window_params = [{transform_indices = @transform_0, window_bounds = array<i64: 8, 2>}, {pipeline_mode = #tpu.pipeline_mode<synchronous>, transform_indices = @transform_1, window_bounds = array<i64: 2, 256>}, {pipeline_mode = #tpu.pipeline_mode<synchronous>, transform_indices = @transform_2, window_bounds = array<i64: 1, 256>}, {pipeline_mode = #tpu.pipeline_mode<synchronous>, transform_indices = @transform_3, window_bounds = array<i64: 256, 512>}, {pipeline_mode = #tpu.pipeline_mode<synchronous>, transform_indices = @transform_4, window_bounds = array<i64: 1, 512>}, {pipeline_mode = #tpu.pipeline_mode<synchronous>, transform_indices = @transform_5, window_bounds = array<i64: 512, 256>}, {pipeline_mode = #tpu.pipeline_mode<synchronous>, transform_indices = @transform_6, window_bounds = array<i64: 1, 256>}, {pipeline_mode = #tpu.pipeline_mode<synchronous>, transform_indices = @transform_7, window_bounds = array<i64: 1, 256>}, {pipeline_mode = #tpu.pipeline_mode<synchronous>, transform_indices = @transform_8, window_bounds = array<i64: 256, 512>}, {pipeline_mode = #tpu.pipeline_mode<synchronous>, transform_indices = @transform_9, window_bounds = array<i64: 1, 512>}, {pipeline_mode = #tpu.pipeline_mode<synchronous>, transform_indices = @transform_10, window_bounds = array<i64: 1, 512>}, {pipeline_mode = #tpu.pipeline_mode<synchronous>, transform_indices = @transform_11, window_bounds = array<i64: 1, 1>}, {transform_indices = @transform_12, window_bounds = array<i64: 8, 1>}]} {
    %c0 = arith.constant 0 : index
    %c0_0 = arith.constant 0 : index
    %0 = vector.load %arg1[%c0, %c0_0] : memref<8x2xf32, #tpu.memory_space<vmem>>, vector<8x2xf32>
    %c0_1 = arith.constant 0 : index
    %c0_2 = arith.constant 0 : index
    %1 = vector.load %arg2[%c0_1, %c0_2] : memref<2x256xf32, #tpu.memory_space<vmem>>, vector<2x256xf32>
    %2 = vector.extract_strided_slice %0 {offsets = [0, 0], sizes = [8, 1], strides = [1, 1]} : vector<8x2xf32> to vector<8x1xf32>
    %3 = vector.extract_strided_slice %1 {offsets = [0, 0], sizes = [1, 256], strides = [1, 1]} : vector<2x256xf32> to vector<1x256xf32>
    %4 = vector.broadcast %2 : vector<8x1xf32> to vector<8x256xf32>
    %5 = vector.broadcast %3 : vector<1x256xf32> to vector<8x256xf32>
    %6 = arith.mulf %4, %5 : vector<8x256xf32>
    %7 = vector.extract_strided_slice %0 {offsets = [0, 1], sizes = [8, 1], strides = [1, 1]} : vector<8x2xf32> to vector<8x1xf32>
    %8 = vector.extract_strided_slice %1 {offsets = [1, 0], sizes = [1, 256], strides = [1, 1]} : vector<2x256xf32> to vector<1x256xf32>
    %9 = vector.broadcast %7 : vector<8x1xf32> to vector<8x256xf32>
    %10 = vector.broadcast %8 : vector<1x256xf32> to vector<8x256xf32>
    %11 = arith.mulf %9, %10 : vector<8x256xf32>
    %12 = arith.addf %6, %11 : vector<8x256xf32>
    %c0_3 = arith.constant 0 : index
    %c0_4 = arith.constant 0 : index
    %13 = vector.load %arg3[%c0_3, %c0_4] : memref<1x256xf32, #tpu.memory_space<vmem>>, vector<1x256xf32>
    %14 = vector.broadcast %13 : vector<1x256xf32> to vector<8x256xf32>
    %15 = arith.addf %12, %14 : vector<8x256xf32>
    %cst = arith.constant 0.000000e+00 : f32
    %16 = vector.broadcast %cst : f32 to vector<8x256xf32>
    %17 = arith.maximumf %15, %16 : vector<8x256xf32>
    %18 = arith.truncf %17 : vector<8x256xf32> to vector<8x256xbf16>
    %c0_5 = arith.constant 0 : index
    %c0_6 = arith.constant 0 : index
    %19 = vector.load %arg4[%c0_5, %c0_6] : memref<256x512xbf16, #tpu.memory_space<vmem>>, vector<256x512xbf16>
    %cst_7 = arith.constant dense<0.000000e+00> : vector<8x512xf32>
    %20 = tpu.matmul %18, %19, %cst_7 {dimension_numbers = #tpu.dot_dimension_numbers<[1], [0], [0], [1], [0, 0, 1, 1], [], []>} : vector<8x256xbf16>, vector<256x512xbf16>, vector<8x512xf32> -> vector<8x512xf32>
    %c0_8 = arith.constant 0 : index
    %c0_9 = arith.constant 0 : index
    %21 = vector.load %arg5[%c0_8, %c0_9] : memref<1x512xf32, #tpu.memory_space<vmem>>, vector<1x512xf32>
    %22 = vector.broadcast %21 : vector<1x512xf32> to vector<8x512xf32>
    %23 = arith.addf %20, %22 : vector<8x512xf32>
    %cst_10 = arith.constant 0.000000e+00 : f32
    %24 = vector.broadcast %cst_10 : f32 to vector<8x512xf32>
    %25 = arith.maximumf %23, %24 : vector<8x512xf32>
    %26 = arith.truncf %25 : vector<8x512xf32> to vector<8x512xbf16>
    %c0_11 = arith.constant 0 : index
    %c0_12 = arith.constant 0 : index
    %27 = vector.load %arg6[%c0_11, %c0_12] : memref<512x256xbf16, #tpu.memory_space<vmem>>, vector<512x256xbf16>
    %cst_13 = arith.constant dense<0.000000e+00> : vector<8x256xf32>
    %28 = tpu.matmul %26, %27, %cst_13 {dimension_numbers = #tpu.dot_dimension_numbers<[1], [0], [0], [1], [0, 0, 1, 1], [], []>} : vector<8x512xbf16>, vector<512x256xbf16>, vector<8x256xf32> -> vector<8x256xf32>
    %c0_14 = arith.constant 0 : index
    %c0_15 = arith.constant 0 : index
    %29 = vector.load %arg7[%c0_14, %c0_15] : memref<1x256xf32, #tpu.memory_space<vmem>>, vector<1x256xf32>
    %30 = vector.broadcast %29 : vector<1x256xf32> to vector<8x256xf32>
    %31 = arith.addf %28, %30 : vector<8x256xf32>
    %cst_16 = arith.constant 0.000000e+00 : f32
    %32 = vector.broadcast %cst_16 : f32 to vector<8x256xf32>
    %33 = arith.maximumf %31, %32 : vector<8x256xf32>
    %c0_17 = arith.constant 0 : index
    %c0_18 = arith.constant 0 : index
    %34 = vector.load %arg8[%c0_17, %c0_18] : memref<1x256xf32, #tpu.memory_space<vmem>>, vector<1x256xf32>
    %35 = vector.broadcast %34 : vector<1x256xf32> to vector<8x256xf32>
    %36 = arith.mulf %33, %35 : vector<8x256xf32>
    %cst_19 = arith.constant dense<0.000000e+00> : vector<8xf32>
    %37 = vector.multi_reduction <add>, %36, %cst_19 [1] : vector<8x256xf32> to vector<8xf32>
    %38 = vector.shape_cast %37 : vector<8xf32> to vector<8x1xf32>
    %cst_20 = arith.constant 0.000000e+00 : f32
    %39 = vector.broadcast %cst_20 : f32 to vector<8x256xf32>
    %40 = arith.cmpf ogt, %33, %39 : vector<8x256xf32>
    %41 = arith.extui %40 : vector<8x256xi1> to vector<8x256xi32>
    %42 = arith.sitofp %41 : vector<8x256xi32> to vector<8x256xf32>
    %43 = arith.truncf %42 : vector<8x256xf32> to vector<8x256xbf16>
    %c0_21 = arith.constant 0 : index
    %c0_22 = arith.constant 0 : index
    %44 = vector.load %arg9[%c0_21, %c0_22] : memref<256x512xbf16, #tpu.memory_space<vmem>>, vector<256x512xbf16>
    %cst_23 = arith.constant dense<0.000000e+00> : vector<8x512xf32>
    %45 = tpu.matmul %43, %44, %cst_23 {dimension_numbers = #tpu.dot_dimension_numbers<[1], [0], [0], [1], [0, 0, 1, 1], [], []>} : vector<8x256xbf16>, vector<256x512xbf16>, vector<8x512xf32> -> vector<8x512xf32>
    %c0_24 = arith.constant 0 : index
    %c0_25 = arith.constant 0 : index
    %46 = vector.load %arg10[%c0_24, %c0_25] : memref<1x512xf32, #tpu.memory_space<vmem>>, vector<1x512xf32>
    %47 = vector.broadcast %46 : vector<1x512xf32> to vector<8x512xf32>
    %48 = arith.addf %45, %47 : vector<8x512xf32>
    %49 = arith.truncf %48 : vector<8x512xf32> to vector<8x512xbf16>
    %50 = math.tanh %49 : vector<8x512xbf16>
    %c0_26 = arith.constant 0 : index
    %c0_27 = arith.constant 0 : index
    %51 = vector.load %arg11[%c0_26, %c0_27] : memref<1x512xf32, #tpu.memory_space<vmem>>, vector<1x512xf32>
    %52 = arith.extf %50 : vector<8x512xbf16> to vector<8x512xf32>
    %53 = vector.broadcast %51 : vector<1x512xf32> to vector<8x512xf32>
    %54 = arith.mulf %52, %53 : vector<8x512xf32>
    %cst_28 = arith.constant dense<0.000000e+00> : vector<8xf32>
    %55 = vector.multi_reduction <add>, %54, %cst_28 [1] : vector<8x512xf32> to vector<8xf32>
    %56 = vector.shape_cast %55 : vector<8xf32> to vector<8x1xf32>
    %c0_29 = arith.constant 0 : index
    %c0_30 = arith.constant 0 : index
    %57 = vector.load %arg12[%c0_29, %c0_30] : memref<1x1xf32, #tpu.memory_space<vmem>>, vector<1x1xf32>
    %58 = vector.broadcast %57 : vector<1x1xf32> to vector<8x1xf32>
    %59 = arith.addf %56, %58 : vector<8x1xf32>
    %60 = arith.addf %38, %59 : vector<8x1xf32>
    %c0_31 = arith.constant 0 : index
    %c0_32 = arith.constant 0 : index
    %61 = vector.load %arg13[%c0_31, %c0_32] : memref<8x1xf32, #tpu.memory_space<vmem>>, vector<8x1xf32>
    tpu.vector_store %arg13[%c0_31, %c0_32], %60 {strides = array<i32>} : memref<8x1xf32, #tpu.memory_space<vmem>>, vector<8x1xf32>,
    return
  }
  func.func @transform_0(%arg0: i32) -> (i32, i32) {
    %c0_i32 = arith.constant 0 : i32
    %c0_i32_0 = arith.constant 0 : i32
    return %arg0, %c0_i32 : i32, i32
  }
  func.func @transform_1(%arg0: i32) -> (i32, i32) {
    %c0_i32 = arith.constant 0 : i32
    %c0_i32_0 = arith.constant 0 : i32
    %c0_i32_1 = arith.constant 0 : i32
    return %c0_i32, %c0_i32_0 : i32, i32
  }
  func.func @transform_2(%arg0: i32) -> (i32, i32) {
    %c0_i32 = arith.constant 0 : i32
    %c0_i32_0 = arith.constant 0 : i32
    %c0_i32_1 = arith.constant 0 : i32
    return %c0_i32, %c0_i32_0 : i32, i32
  }
  func.func @transform_3(%arg0: i32) -> (i32, i32) {
    %c0_i32 = arith.constant 0 : i32
    %c0_i32_0 = arith.constant 0 : i32
    %c0_i32_1 = arith.constant 0 : i32
    return %c0_i32, %c0_i32_0 : i32, i32
  }
  func.func @transform_4(%arg0: i32) -> (i32, i32) {
    %c0_i32 = arith.constant 0 : i32
    %c0_i32_0 = arith.constant 0 : i32
    %c0_i32_1 = arith.constant 0 : i32
    return %c0_i32, %c0_i32_0 : i32, i32
  }
  func.func @transform_5(%arg0: i32) -> (i32, i32) {
    %c0_i32 = arith.constant 0 : i32
    %c0_i32_0 = arith.constant 0 : i32
    %c0_i32_1 = arith.constant 0 : i32
    return %c0_i32, %c0_i32_0 : i32, i32
  }
  func.func @transform_6(%arg0: i32) -> (i32, i32) {
    %c0_i32 = arith.constant 0 : i32
    %c0_i32_0 = arith.constant 0 : i32
    %c0_i32_1 = arith.constant 0 : i32
    return %c0_i32, %c0_i32_0 : i32, i32
  }
  func.func @transform_7(%arg0: i32) -> (i32, i32) {
    %c0_i32 = arith.constant 0 : i32
    %c0_i32_0 = arith.constant 0 : i32
    %c0_i32_1 = arith.constant 0 : i32
    return %c0_i32, %c0_i32_0 : i32, i32
  }
  func.func @transform_8(%arg0: i32) -> (i32, i32) {
    %c0_i32 = arith.constant 0 : i32
    %c0_i32_0 = arith.constant 0 : i32
    %c0_i32_1 = arith.constant 0 : i32
    return %c0_i32, %c0_i32_0 : i32, i32
  }
  func.func @transform_9(%arg0: i32) -> (i32, i32) {
    %c0_i32 = arith.constant 0 : i32
    %c0_i32_0 = arith.constant 0 : i32
    %c0_i32_1 = arith.constant 0 : i32
    return %c0_i32, %c0_i32_0 : i32, i32
  }
  func.func @transform_10(%arg0: i32) -> (i32, i32) {
    %c0_i32 = arith.constant 0 : i32
    %c0_i32_0 = arith.constant 0 : i32
    %c0_i32_1 = arith.constant 0 : i32
    return %c0_i32, %c0_i32_0 : i32, i32
  }
  func.func @transform_11(%arg0: i32) -> (i32, i32) {
    %c0_i32 = arith.constant 0 : i32
    %c0_i32_0 = arith.constant 0 : i32
    %c0_i32_1 = arith.constant 0 : i32
    return %c0_i32, %c0_i32_0 : i32, i32
  }
  func.func @transform_12(%arg0: i32) -> (i32, i32) {
    %c0_i32 = arith.constant 0 : i32
    %c0_i32_0 = arith.constant 0 : i32
    return %arg0, %c0_i32 : i32, i32
  }
}

</mosaic_0001>

<llo_original>
// kernel: tpu_custom_call.1
$region0: #{tpu_custom_call.1}
  #allocation0 [shape = 'u32[]', space=smem, size = 0x4, offset = 0x4, fixed_abs, tag = 'smem constant byte address 0x4 - core index']
  #allocation1 [shape = 'u32[144,128]{1,0:T(1,128)}', space=vmem, size = 0x12000, scoped, tag = 'internal scratch']
  #allocation2 [shape = 'f32[1,1]{1,0:T(1,128)S(1)}', space=vmem, size = 0x200, scoped, tag = 'scoped memory for tpu_custom_call.1']
  %s0 = inlined_call_operand.vmem [shape: f32[8,2], index: 0, kind: input, shape index: {}]
  %s1 = inlined_call_operand.vmem [shape: f32[2,256], index: 1, kind: input, shape index: {}]
  %s2 = inlined_call_operand.vmem [shape: f32[1,256], index: 2, kind: input, shape index: {}]
  %s3 = inlined_call_operand.hbm [shape: bf16[256,512], index: 3, kind: input, shape index: {}]
  %s4 = inlined_call_operand.vmem [shape: f32[1,512], index: 4, kind: input, shape index: {}]
  %s5 = inlined_call_operand.hbm [shape: bf16[512,256], index: 5, kind: input, shape index: {}]
  %s6 = inlined_call_operand.vmem [shape: f32[1,256], index: 6, kind: input, shape index: {}]
  %s7 = inlined_call_operand.vmem [shape: f32[1,256], index: 7, kind: input, shape index: {}]
  %s8 = inlined_call_operand.hbm [shape: bf16[256,512], index: 8, kind: input, shape index: {}]
  %s9 = inlined_call_operand.vmem [shape: f32[1,512], index: 9, kind: input, shape index: {}]
  %s10 = inlined_call_operand.vmem [shape: f32[1,512], index: 10, kind: input, shape index: {}]
  %s11 = inlined_call_operand.<no memory space> [shape: f32[1,1], index: 11, kind: input, shape index: {}]
  %s12 = inlined_call_operand.vmem [shape: f32[8,1], index: 12, kind: output, shape index: {}]
  %s13 = sld [smem:[#allocation0]]
  $region70: #{tpu_custom_call.1} parent=0
    _
  %s15 = ssub.s32 1, %s13
  %s16 = scalar_select 0, %s15, %s13
  %v17 = vstv %s11
  %18 = vst [vmem:[#allocation2] sm:$0x1] %v17
  $region1: #{tpu_custom_call.1} parent=0
    #allocation3 [shape = 'u8[262144]{0}', space=vmem, size = 0x40000, scoped, tag = 'input window, operand 3, single buffered']
    #allocation4 [shape = 's32[1]{0}', space=sflag, size = 0x4, scoped, tag = 'scoped memory for tpu_custom_call.1']
    #allocation5 [shape = 'u8[262144]{0}', space=vmem, size = 0x40000, scoped, tag = 'input window, operand 5, single buffered']
    #allocation6 [shape = 's32[1]{0}', space=sflag, size = 0x4, scoped, tag = 'scoped memory for tpu_custom_call.1']
    #allocation7 [shape = 'u8[262144]{0}', space=vmem, size = 0x40000, scoped, tag = 'input window, operand 8, single buffered']
    %19 = vsyncpa [#allocation4], 0
    %20 = vsyncpa [#allocation6], 0
    // Predicated region
    $region2: #{tpu_custom_call.1} parent=1 // pred_check
      _
    $region3: #{tpu_custom_call.1} parent=1 // pred_check_branch
      %22 = sbr.rel (0) target = $region5
    $region4: #{tpu_custom_call.1} parent=1 // pred_region
      _
    $region5: #{tpu_custom_call.1} parent=1 // pred_fallthru
      _
    // Predicated region
    $region6: #{tpu_custom_call.1} parent=1 // pred_check
      _
    $region7: #{tpu_custom_call.1} parent=1 // pred_check_branch
      %24 = sbr.rel (0) target = $region9
    $region8: #{tpu_custom_call.1} parent=1 // pred_region
      _
    $region9: #{tpu_custom_call.1} parent=1 // pred_fallthru
      _
    // Predicated region
    $region10: #{tpu_custom_call.1} parent=1 // pred_check
      _
    $region11: #{tpu_custom_call.1} parent=1 // pred_check_branch
      %26 = sbr.rel (0) target = $region13
    $region12: #{tpu_custom_call.1} parent=1 // pred_region
      _
    $region13: #{tpu_custom_call.1} parent=1 // pred_fallthru
      _
    // Predicated region
    $region14: #{tpu_custom_call.1} parent=1 // pred_check
      _
    $region15: #{tpu_custom_call.1} parent=1 // pred_check_branch
      %28 = sbr.rel (0) target = $region17
    $region16: #{tpu_custom_call.1} parent=1 // pred_region
      %s30 = ssub.s32 8192, 8192
      %31 = vsyncadd [#allocation4], %s30
      %s32 = sshll.u32 [#allocation3], 4
      %s33 = int_to_ptr.vmem [resolvable:$true] %s32
      %38 = dma.hbm_to_vmem [thread:$0]  %s3, 8192, %s33, [#allocation4], 256, 256, 16
    $region17: #{tpu_custom_call.1} parent=1 // pred_fallthru
      _
    // Predicated region
    $region18: #{tpu_custom_call.1} parent=1 // pred_check
      _
    $region19: #{tpu_custom_call.1} parent=1 // pred_check_branch
      %40 = sbr.rel (0) target = $region21
    $region20: #{tpu_custom_call.1} parent=1 // pred_region
      _
    $region21: #{tpu_custom_call.1} parent=1 // pred_fallthru
      _
    // Predicated region
    $region22: #{tpu_custom_call.1} parent=1 // pred_check
      _
    $region23: #{tpu_custom_call.1} parent=1 // pred_check_branch
      %42 = sbr.rel (0) target = $region25
    $region24: #{tpu_custom_call.1} parent=1 // pred_region
      %s44 = ssub.s32 8192, 8192
      %45 = vsyncadd [#allocation6], %s44
      %s46 = sshll.u32 [#allocation5], 4
      %s47 = int_to_ptr.vmem [resolvable:$true] %s46
      %52 = dma.hbm_to_vmem [thread:$0]  %s5, 8192, %s47, [#allocation6], 128, 128, 8
    $region25: #{tpu_custom_call.1} parent=1 // pred_fallthru
      _
    // Predicated region
    $region26: #{tpu_custom_call.1} parent=1 // pred_check
      _
    $region27: #{tpu_custom_call.1} parent=1 // pred_check_branch
      %54 = sbr.rel (0) target = $region29
    $region28: #{tpu_custom_call.1} parent=1 // pred_region
      _
    $region29: #{tpu_custom_call.1} parent=1 // pred_fallthru
      _
    // Predicated region
    $region30: #{tpu_custom_call.1} parent=1 // pred_check
      _
    $region31: #{tpu_custom_call.1} parent=1 // pred_check_branch
      %56 = sbr.rel (0) target = $region33
    $region32: #{tpu_custom_call.1} parent=1 // pred_region
      _
    $region33: #{tpu_custom_call.1} parent=1 // pred_fallthru
      _
    // Predicated region
    $region34: #{tpu_custom_call.1} parent=1 // pred_check
      _
    $region35: #{tpu_custom_call.1} parent=1 // pred_check_branch
      %58 = sbr.rel (0) target = $region37
    $region36: #{tpu_custom_call.1} parent=1 // pred_region
      %s60 = ssub.s32 8192, 8192
      %61 = vsyncadd [#allocation6], %s60
      %s62 = sshll.u32 [#allocation7], 4
      %s63 = int_to_ptr.vmem [resolvable:$true] %s62
      %68 = dma.hbm_to_vmem [thread:$0]  %s8, 8192, %s63, [#allocation6], 256, 256, 16
    $region37: #{tpu_custom_call.1} parent=1 // pred_fallthru
      _
    // Predicated region
    $region38: #{tpu_custom_call.1} parent=1 // pred_check
      _
    $region39: #{tpu_custom_call.1} parent=1 // pred_check_branch
      %70 = sbr.rel (0) target = $region41
    $region40: #{tpu_custom_call.1} parent=1 // pred_region
      _
    $region41: #{tpu_custom_call.1} parent=1 // pred_fallthru
      _
    // Predicated region
    $region42: #{tpu_custom_call.1} parent=1 // pred_check
      _
    $region43: #{tpu_custom_call.1} parent=1 // pred_check_branch
      %72 = sbr.rel (0) target = $region45
    $region44: #{tpu_custom_call.1} parent=1 // pred_region
      _
    $region45: #{tpu_custom_call.1} parent=1 // pred_fallthru
      _
    // Predicated region
    $region46: #{tpu_custom_call.1} parent=1 // pred_check
      _
    $region47: #{tpu_custom_call.1} parent=1 // pred_check_branch
      %74 = sbr.rel (0) target = $region49
    $region48: #{tpu_custom_call.1} parent=1 // pred_region
      _
    $region49: #{tpu_custom_call.1} parent=1 // pred_fallthru
      _
    // Predicated region
    $region50: #{tpu_custom_call.1} parent=1 // pred_check
      _
    $region51: #{tpu_custom_call.1} parent=1 // pred_check_branch
      %76 = sbr.rel (0) target = $region53
    $region52: #{tpu_custom_call.1} parent=1 // pred_region
      %77 = dma.done [#allocation4], 8192
    $region53: #{tpu_custom_call.1} parent=1 // pred_fallthru
      _
    // Predicated region
    $region54: #{tpu_custom_call.1} parent=1 // pred_check
      _
    $region55: #{tpu_custom_call.1} parent=1 // pred_check_branch
      %79 = sbr.rel (0) target = $region57
    $region56: #{tpu_custom_call.1} parent=1 // pred_region
      %80 = dma.done [#allocation6], 8192
    $region57: #{tpu_custom_call.1} parent=1 // pred_fallthru
      _
    // Predicated region
    $region58: #{tpu_custom_call.1} parent=1 // pred_check
      _
    $region59: #{tpu_custom_call.1} parent=1 // pred_check_branch
      %82 = sbr.rel (0) target = $region61
    $region60: #{tpu_custom_call.1} parent=1 // pred_region
      %83 = dma.done [#allocation6], 8192
    $region61: #{tpu_custom_call.1} parent=1 // pred_fallthru
      _
    %v84 = vld [vmem:[%s0] sm:$0xff]
    %v85 = vld [vmem:[%s1] sm:$0xf]
    %87 = vset.pattern.permute.xlu0 0
    %88 = vperm.xlu0 %87, %v84
    %v89 = vpop.permute.xlu0 %88
    %v92 = vlaneseq
    %v93 = vshrl.u32 %v92, 7
    %v94 = vsub.s32 0, %v93
    %v95 = vrot.slane %v85, %v94
    %v96 = vlaneseq
    %v97 = vshrl.u32 %v96, 7
    %v98 = vsub.s32 2, %v97
    %v99 = vrot.slane %v85, %v98
    %v102 = vlaneseq
    %v103 = vshrl.u32 %v102, 7
    %v104 = vsub.s32 0, %v103
    %v105 = vrot.slane %v95, %v104
    %v106 = vlaneseq
    %v107 = vshrl.u32 %v106, 7
    %v108 = vsub.s32 0, %v107
    %v109 = vrot.slane %v99, %v108
    %v110 = vmul.f32 %v89, %v105
    %v111 = vmul.f32 %v89, %v109
    %112 = vset.pattern.permute.xlu0 1
    %113 = vperm.xlu0 %112, %v84
    %v114 = vpop.permute.xlu0 %113
    %v116 = vlaneseq
    %v117 = vshrl.u32 %v116, 7
    %v118 = vsub.s32 1, %v117
    %v119 = vrot.slane %v85, %v118
    %v120 = vlaneseq
    %v121 = vshrl.u32 %v120, 7
    %v122 = vsub.s32 3, %v121
    %v123 = vrot.slane %v85, %v122
    %v126 = vlaneseq
    %v127 = vshrl.u32 %v126, 7
    %v128 = vsub.s32 1, %v127
    %v129 = vrot.slane %v119, %v128
    %v130 = vlaneseq
    %v131 = vshrl.u32 %v130, 7
    %v132 = vsub.s32 1, %v131
    %v133 = vrot.slane %v123, %v132
    %v134 = vmul.f32 %v114, %v129
    %v135 = vmul.f32 %v114, %v133
    %v136 = vadd.f32 %v110, %v134
    %v137 = vadd.f32 %v111, %v135
    %v138 = vld [vmem:[%s2] sm:$0x3]
    %v140 = vlaneseq
    %v141 = vshrl.u32 %v140, 7
    %v142 = vsub.s32 0, %v141
    %v143 = vrot.slane %v138, %v142
    %v144 = vlaneseq
    %v145 = vshrl.u32 %v144, 7
    %v146 = vsub.s32 1, %v145
    %v147 = vrot.slane %v138, %v146
    %v150 = vadd.f32 %v136, %v143
    %v151 = vadd.f32 %v137, %v147
    %v152 = vmax.f32 %v150, 0.0
    %v153 = vmax.f32 %v151, 0.0
    %v154 = vpack.c.bf16 %v152, %v152
    %v155 = vpack.c.bf16 %v153, %v153
    %v156 = vld [vmem:[#allocation3] sm:$0xff]
    %v157 = vld [vmem:[#allocation3 + $0x8] sm:$0xff]
    %v158 = vld [vmem:[#allocation3 + $0x10] sm:$0xff]
    %v159 = vld [vmem:[#allocation3 + $0x18] sm:$0xff]
    %v160 = vld [vmem:[#allocation3 + $0x20] sm:$0xff]
    %v161 = vld [vmem:[#allocation3 + $0x28] sm:$0xff]
    %v162 = vld [vmem:[#allocation3 + $0x30] sm:$0xff]
    %v163 = vld [vmem:[#allocation3 + $0x38] sm:$0xff]
    %v164 = vld [vmem:[#allocation3 + $0x40] sm:$0xff]
    %v165 = vld [vmem:[#allocation3 + $0x48] sm:$0xff]
    %v166 = vld [vmem:[#allocation3 + $0x50] sm:$0xff]
    %v167 = vld [vmem:[#allocation3 + $0x58] sm:$0xff]
    %v168 = vld [vmem:[#allocation3 + $0x60] sm:$0xff]
    %v169 = vld [vmem:[#allocation3 + $0x68] sm:$0xff]
    %v170 = vld [vmem:[#allocation3 + $0x70] sm:$0xff]
    %v171 = vld [vmem:[#allocation3 + $0x78] sm:$0xff]
    %v172 = vld [vmem:[#allocation3 + $0x80] sm:$0xff]
    %v173 = vld [vmem:[#allocation3 + $0x88] sm:$0xff]
    %v174 = vld [vmem:[#allocation3 + $0x90] sm:$0xff]
    %v175 = vld [vmem:[#allocation3 + $0x98] sm:$0xff]
    %v176 = vld [vmem:[#allocation3 + $0xa0] sm:$0xff]
    %v177 = vld [vmem:[#allocation3 + $0xa8] sm:$0xff]
    %v178 = vld [vmem:[#allocation3 + $0xb0] sm:$0xff]
    %v179 = vld [vmem:[#allocation3 + $0xb8] sm:$0xff]
    %v180 = vld [vmem:[#allocation3 + $0xc0] sm:$0xff]
    %v181 = vld [vmem:[#allocation3 + $0xc8] sm:$0xff]
    %v182 = vld [vmem:[#allocation3 + $0xd0] sm:$0xff]
    %v183 = vld [vmem:[#allocation3 + $0xd8] sm:$0xff]
    %v184 = vld [vmem:[#allocation3 + $0xe0] sm:$0xff]
    %v185 = vld [vmem:[#allocation3 + $0xe8] sm:$0xff]
    %v186 = vld [vmem:[#allocation3 + $0xf0] sm:$0xff]
    %v187 = vld [vmem:[#allocation3 + $0xf8] sm:$0xff]
    %v188 = vld [vmem:[#allocation3 + $0x100] sm:$0xff]
    %v189 = vld [vmem:[#allocation3 + $0x108] sm:$0xff]
    %v190 = vld [vmem:[#allocation3 + $0x110] sm:$0xff]
    %v191 = vld [vmem:[#allocation3 + $0x118] sm:$0xff]
    %v192 = vld [vmem:[#allocation3 + $0x120] sm:$0xff]
    %v193 = vld [vmem:[#allocation3 + $0x128] sm:$0xff]
    %v194 = vld [vmem:[#allocation3 + $0x130] sm:$0xff]
    %v195 = vld [vmem:[#allocation3 + $0x138] sm:$0xff]
    %v196 = vld [vmem:[#allocation3 + $0x140] sm:$0xff]
    %v197 = vld [vmem:[#allocation3 + $0x148] sm:$0xff]
    %v198 = vld [vmem:[#allocation3 + $0x150] sm:$0xff]
    %v199 = vld [vmem:[#allocation3 + $0x158] sm:$0xff]
    %v200 = vld [vmem:[#allocation3 + $0x160] sm:$0xff]
    %v201 = vld [vmem:[#allocation3 + $0x168] sm:$0xff]
    %v202 = vld [vmem:[#allocation3 + $0x170] sm:$0xff]
    %v203 = vld [vmem:[#allocation3 + $0x178] sm:$0xff]
    %v204 = vld [vmem:[#allocation3 + $0x180] sm:$0xff]
    %v205 = vld [vmem:[#allocation3 + $0x188] sm:$0xff]
    %v206 = vld [vmem:[#allocation3 + $0x190] sm:$0xff]
    %v207 = vld [vmem:[#allocation3 + $0x198] sm:$0xff]
    %v208 = vld [vmem:[#allocation3 + $0x1a0] sm:$0xff]
    %v209 = vld [vmem:[#allocation3 + $0x1a8] sm:$0xff]
    %v210 = vld [vmem:[#allocation3 + $0x1b0] sm:$0xff]
    %v211 = vld [vmem:[#allocation3 + $0x1b8] sm:$0xff]
    %v212 = vld [vmem:[#allocation3 + $0x1c0] sm:$0xff]
    %v213 = vld [vmem:[#allocation3 + $0x1c8] sm:$0xff]
    %v214 = vld [vmem:[#allocation3 + $0x1d0] sm:$0xff]
    %v215 = vld [vmem:[#allocation3 + $0x1d8] sm:$0xff]
    %v216 = vld [vmem:[#allocation3 + $0x1e0] sm:$0xff]
    %v217 = vld [vmem:[#allocation3 + $0x1e8] sm:$0xff]
    %v218 = vld [vmem:[#allocation3 + $0x1f0] sm:$0xff]
    %v219 = vld [vmem:[#allocation3 + $0x1f8] sm:$0xff]
    %v220 = vld [vmem:[%s4] sm:$0xf]
    %v222 = vlaneseq
    %v223 = vshrl.u32 %v222, 7
    %v224 = vsub.s32 0, %v223
    %v225 = vrot.slane %v220, %v224
    %v226 = vlaneseq
    %v227 = vshrl.u32 %v226, 7
    %v228 = vsub.s32 1, %v227
    %v229 = vrot.slane %v220, %v228
    %v230 = vlaneseq
    %v231 = vshrl.u32 %v230, 7
    %v232 = vsub.s32 2, %v231
    %v233 = vrot.slane %v220, %v232
    %v234 = vlaneseq
    %v235 = vshrl.u32 %v234, 7
    %v236 = vsub.s32 3, %v235
    %v237 = vrot.slane %v220, %v236
    %v306 = vunpack.c.l.b16 %v156
    %v307 = vunpack.c.h.b16 %v156
    %v308 = vunpack.c.l.b16 %v157
    %v309 = vunpack.c.h.b16 %v157
    %v310 = vunpack.c.l.b16 %v158
    %v311 = vunpack.c.h.b16 %v158
    %v312 = vunpack.c.l.b16 %v159
    %v313 = vunpack.c.h.b16 %v159
    %v314 = vunpack.c.l.b16 %v160
    %v315 = vunpack.c.h.b16 %v160
    %v316 = vunpack.c.l.b16 %v161
    %v317 = vunpack.c.h.b16 %v161
    %v318 = vunpack.c.l.b16 %v162
    %v319 = vunpack.c.h.b16 %v162
    %v320 = vunpack.c.l.b16 %v163
    %v321 = vunpack.c.h.b16 %v163
    %v322 = vunpack.c.l.b16 %v164
    %v323 = vunpack.c.h.b16 %v164
    %v324 = vunpack.c.l.b16 %v165
    %v325 = vunpack.c.h.b16 %v165
    %v326 = vunpack.c.l.b16 %v166
    %v327 = vunpack.c.h.b16 %v166
    %v328 = vunpack.c.l.b16 %v167
    %v329 = vunpack.c.h.b16 %v167
    %v330 = vunpack.c.l.b16 %v168
    %v331 = vunpack.c.h.b16 %v168
    %v332 = vunpack.c.l.b16 %v169
    %v333 = vunpack.c.h.b16 %v169
    %v334 = vunpack.c.l.b16 %v170
    %v335 = vunpack.c.h.b16 %v170
    %v336 = vunpack.c.l.b16 %v171
    %v337 = vunpack.c.h.b16 %v171
    %v338 = vunpack.c.l.b16 %v172
    %v339 = vunpack.c.h.b16 %v172
    %v340 = vunpack.c.l.b16 %v173
    %v341 = vunpack.c.h.b16 %v173
    %v342 = vunpack.c.l.b16 %v174
    %v343 = vunpack.c.h.b16 %v174
    %v344 = vunpack.c.l.b16 %v175
    %v345 = vunpack.c.h.b16 %v175
    %v346 = vunpack.c.l.b16 %v176
    %v347 = vunpack.c.h.b16 %v176
    %v348 = vunpack.c.l.b16 %v177
    %v349 = vunpack.c.h.b16 %v177
    %v350 = vunpack.c.l.b16 %v178
    %v351 = vunpack.c.h.b16 %v178
    %v352 = vunpack.c.l.b16 %v179
    %v353 = vunpack.c.h.b16 %v179
    %v354 = vunpack.c.l.b16 %v180
    %v355 = vunpack.c.h.b16 %v180
    %v356 = vunpack.c.l.b16 %v181
    %v357 = vunpack.c.h.b16 %v181
    %v358 = vunpack.c.l.b16 %v182
    %v359 = vunpack.c.h.b16 %v182
    %v360 = vunpack.c.l.b16 %v183
    %v361 = vunpack.c.h.b16 %v183
    %v362 = vunpack.c.l.b16 %v184
    %v363 = vunpack.c.h.b16 %v184
    %v364 = vunpack.c.l.b16 %v185
    %v365 = vunpack.c.h.b16 %v185
    %v366 = vunpack.c.l.b16 %v186
    %v367 = vunpack.c.h.b16 %v186
    %v368 = vunpack.c.l.b16 %v187
    %v369 = vunpack.c.h.b16 %v187
    %v370 = vunpack.c.l.b16 %v188
    %v371 = vunpack.c.h.b16 %v188
    %v372 = vunpack.c.l.b16 %v189
    %v373 = vunpack.c.h.b16 %v189
    %v374 = vunpack.c.l.b16 %v190
    %v375 = vunpack.c.h.b16 %v190
    %v376 = vunpack.c.l.b16 %v191
    %v377 = vunpack.c.h.b16 %v191
    %v378 = vunpack.c.l.b16 %v192
    %v379 = vunpack.c.h.b16 %v192
    %v380 = vunpack.c.l.b16 %v193
    %v381 = vunpack.c.h.b16 %v193
    %v382 = vunpack.c.l.b16 %v194
    %v383 = vunpack.c.h.b16 %v194
    %v384 = vunpack.c.l.b16 %v195
    %v385 = vunpack.c.h.b16 %v195
    %v386 = vunpack.c.l.b16 %v196
    %v387 = vunpack.c.h.b16 %v196
    %v388 = vunpack.c.l.b16 %v197
    %v389 = vunpack.c.h.b16 %v197
    %v390 = vunpack.c.l.b16 %v198
    %v391 = vunpack.c.h.b16 %v198
    %v392 = vunpack.c.l.b16 %v199
    %v393 = vunpack.c.h.b16 %v199
    %v394 = vunpack.c.l.b16 %v200
    %v395 = vunpack.c.h.b16 %v200
    %v396 = vunpack.c.l.b16 %v201
    %v397 = vunpack.c.h.b16 %v201
    %v398 = vunpack.c.l.b16 %v202
    %v399 = vunpack.c.h.b16 %v202
    %v400 = vunpack.c.l.b16 %v203
    %v401 = vunpack.c.h.b16 %v203
    %v402 = vunpack.c.l.b16 %v204
    %v403 = vunpack.c.h.b16 %v204
    %v404 = vunpack.c.l.b16 %v205
    %v405 = vunpack.c.h.b16 %v205
    %v406 = vunpack.c.l.b16 %v206
    %v407 = vunpack.c.h.b16 %v206
    %v408 = vunpack.c.l.b16 %v207
    %v409 = vunpack.c.h.b16 %v207
    %v410 = vunpack.c.l.b16 %v208
    %v411 = vunpack.c.h.b16 %v208
    %v412 = vunpack.c.l.b16 %v209
    %v413 = vunpack.c.h.b16 %v209
    %v414 = vunpack.c.l.b16 %v210
    %v415 = vunpack.c.h.b16 %v210
    %v416 = vunpack.c.l.b16 %v211
    %v417 = vunpack.c.h.b16 %v211
    %v418 = vunpack.c.l.b16 %v212
    %v419 = vunpack.c.h.b16 %v212
    %v420 = vunpack.c.l.b16 %v213
    %v421 = vunpack.c.h.b16 %v213
    %v422 = vunpack.c.l.b16 %v214
    %v423 = vunpack.c.h.b16 %v214
    %v424 = vunpack.c.l.b16 %v215
    %v425 = vunpack.c.h.b16 %v215
    %v426 = vunpack.c.l.b16 %v216
    %v427 = vunpack.c.h.b16 %v216
    %v428 = vunpack.c.l.b16 %v217
    %v429 = vunpack.c.h.b16 %v217
    %v430 = vunpack.c.l.b16 %v218
    %v431 = vunpack.c.h.b16 %v218
    %v432 = vunpack.c.l.b16 %v219
    %v433 = vunpack.c.h.b16 %v219
    %v434 = vpack.c.b16 %v310, %v306
    %v435 = vpack.c.b16 %v311, %v307
    %v436 = vpack.c.b16 %v312, %v308
    %v437 = vpack.c.b16 %v313, %v309
    %v438 = vpack.c.b16 %v318, %v314
    %v439 = vpack.c.b16 %v319, %v315
    %v440 = vpack.c.b16 %v320, %v316
    %v441 = vpack.c.b16 %v321, %v317
    %v442 = vpack.c.b16 %v326, %v322
    %v443 = vpack.c.b16 %v327, %v323
    %v444 = vpack.c.b16 %v328, %v324
    %v445 = vpack.c.b16 %v329, %v325
    %v446 = vpack.c.b16 %v334, %v330
    %v447 = vpack.c.b16 %v335, %v331
    %v448 = vpack.c.b16 %v336, %v332
    %v449 = vpack.c.b16 %v337, %v333
    %v450 = vpack.c.b16 %v342, %v338
    %v451 = vpack.c.b16 %v343, %v339
    %v452 = vpack.c.b16 %v344, %v340
    %v453 = vpack.c.b16 %v345, %v341
    %v454 = vpack.c.b16 %v350, %v346
    %v455 = vpack.c.b16 %v351, %v347
    %v456 = vpack.c.b16 %v352, %v348
    %v457 = vpack.c.b16 %v353, %v349
    %v458 = vpack.c.b16 %v358, %v354
    %v459 = vpack.c.b16 %v359, %v355
    %v460 = vpack.c.b16 %v360, %v356
    %v461 = vpack.c.b16 %v361, %v357
    %v462 = vpack.c.b16 %v366, %v362
    %v463 = vpack.c.b16 %v367, %v363
    %v464 = vpack.c.b16 %v368, %v364
    %v465 = vpack.c.b16 %v369, %v365
    %v466 = vpack.c.b16 %v374, %v370
    %v467 = vpack.c.b16 %v375, %v371
    %v468 = vpack.c.b16 %v376, %v372
    %v469 = vpack.c.b16 %v377, %v373
    %v470 = vpack.c.b16 %v382, %v378
    %v471 = vpack.c.b16 %v383, %v379
    %v472 = vpack.c.b16 %v384, %v380
    %v473 = vpack.c.b16 %v385, %v381
    %v474 = vpack.c.b16 %v390, %v386
    %v475 = vpack.c.b16 %v391, %v387
    %v476 = vpack.c.b16 %v392, %v388
    %v477 = vpack.c.b16 %v393, %v389
    %v478 = vpack.c.b16 %v398, %v394
    %v479 = vpack.c.b16 %v399, %v395
    %v480 = vpack.c.b16 %v400, %v396
    %v481 = vpack.c.b16 %v401, %v397
    %v482 = vpack.c.b16 %v406, %v402
    %v483 = vpack.c.b16 %v407, %v403
    %v484 = vpack.c.b16 %v408, %v404
    %v485 = vpack.c.b16 %v409, %v405
    %v486 = vpack.c.b16 %v414, %v410
    %v487 = vpack.c.b16 %v415, %v411
    %v488 = vpack.c.b16 %v416, %v412
    %v489 = vpack.c.b16 %v417, %v413
    %v490 = vpack.c.b16 %v422, %v418
    %v491 = vpack.c.b16 %v423, %v419
    %v492 = vpack.c.b16 %v424, %v420
    %v493 = vpack.c.b16 %v425, %v421
    %v494 = vpack.c.b16 %v430, %v426
    %v495 = vpack.c.b16 %v431, %v427
    %v496 = vpack.c.b16 %v432, %v428
    %v497 = vpack.c.b16 %v433, %v429
    %562 = vmatprep.subr.bf16.mxu0 %v435
    %563 = vmatpush1.bf16.msra.mxu0 %v434
    %564 = vmatprep.subr.bf16.mxu0 %v439
    %565 = vmatpush1.bf16.msra.mxu0 %v438
    %566 = vmatprep.subr.bf16.mxu0 %v443
    %567 = vmatpush1.bf16.msra.mxu0 %v442
    %568 = vmatprep.subr.bf16.mxu0 %v447
    %569 = vmatpush1.bf16.msra.mxu0 %v446
    %570 = vmatprep.subr.bf16.mxu0 %v451
    %571 = vmatpush1.bf16.msra.mxu0 %v450
    %572 = vmatprep.subr.bf16.mxu0 %v455
    %573 = vmatpush1.bf16.msra.mxu0 %v454
    %574 = vmatprep.subr.bf16.mxu0 %v459
    %575 = vmatpush1.bf16.msra.mxu0 %v458
    %576 = vmatprep.subr.bf16.mxu0 %v463
    %577 = vmatpush1.bf16.msra.mxu0 %v462
    %578 = vmatprep.subr.bf16.mxu0 %v467
    %579 = vmatpush1.bf16.msra.mxu0 %v466
    %580 = vmatprep.subr.bf16.mxu0 %v471
    %581 = vmatpush1.bf16.msra.mxu0 %v470
    %582 = vmatprep.subr.bf16.mxu0 %v475
    %583 = vmatpush1.bf16.msra.mxu0 %v474
    %584 = vmatprep.subr.bf16.mxu0 %v479
    %585 = vmatpush1.bf16.msra.mxu0 %v478
    %586 = vmatprep.subr.bf16.mxu0 %v483
    %587 = vmatpush1.bf16.msra.mxu0 %v482
    %588 = vmatprep.subr.bf16.mxu0 %v487
    %589 = vmatpush1.bf16.msra.mxu0 %v486
    %590 = vmatprep.subr.bf16.mxu0 %v491
    %591 = vmatpush1.bf16.msra.mxu0 %v490
    %592 = vmatprep.subr.bf16.mxu0 %v495
    %593 = vmatpush1.bf16.msra.mxu0 %v494
    %594 = vmatprep.mubr.bf16.mxu0 %v155
    %595 = vmatmul.mubr.bf16.gmra.mrb[0].mxu0 %v154
    %v596 = vpop.f32.mrb[0].mxu0
    %v597 = vadd.f32 %v225, %v596
    %v598 = vpop.f32.mrb[0].mxu0
    %v599 = vadd.f32 %v229, %v598
    %v600 = vpop.f32.mrb[0].mxu0
    %v601 = vpop.f32.mrb[0].mxu0
    %602 = vdwg.mxu0
    %603 = vmatprep.subr.bf16.mxu0 %v437
    %604 = vmatpush1.bf16.msra.mxu0 %v436
    %605 = vmatprep.subr.bf16.mxu0 %v441
    %606 = vmatpush1.bf16.msra.mxu0 %v440
    %607 = vmatprep.subr.bf16.mxu0 %v445
    %608 = vmatpush1.bf16.msra.mxu0 %v444
    %609 = vmatprep.subr.bf16.mxu0 %v449
    %610 = vmatpush1.bf16.msra.mxu0 %v448
    %611 = vmatprep.subr.bf16.mxu0 %v453
    %612 = vmatpush1.bf16.msra.mxu0 %v452
    %613 = vmatprep.subr.bf16.mxu0 %v457
    %614 = vmatpush1.bf16.msra.mxu0 %v456
    %615 = vmatprep.subr.bf16.mxu0 %v461
    %616 = vmatpush1.bf16.msra.mxu0 %v460
    %617 = vmatprep.subr.bf16.mxu0 %v465
    %618 = vmatpush1.bf16.msra.mxu0 %v464
    %619 = vmatprep.subr.bf16.mxu0 %v469
    %620 = vmatpush1.bf16.msra.mxu0 %v468
    %621 = vmatprep.subr.bf16.mxu0 %v473
    %622 = vmatpush1.bf16.msra.mxu0 %v472
    %623 = vmatprep.subr.bf16.mxu0 %v477
    %624 = vmatpush1.bf16.msra.mxu0 %v476
    %625 = vmatprep.subr.bf16.mxu0 %v481
    %626 = vmatpush1.bf16.msra.mxu0 %v480
    %627 = vmatprep.subr.bf16.mxu0 %v485
    %628 = vmatpush1.bf16.msra.mxu0 %v484
    %629 = vmatprep.subr.bf16.mxu0 %v489
    %630 = vmatpush1.bf16.msra.mxu0 %v488
    %631 = vmatprep.subr.bf16.mxu0 %v493
    %632 = vmatpush1.bf16.msra.mxu0 %v492
    %633 = vmatprep.subr.bf16.mxu0 %v497
    %634 = vmatpush1.bf16.msra.mxu0 %v496
    %635 = vmatprep.mubr.bf16.mxu0 %v155
    %636 = vmatmul.mubr.bf16.gmra.mrb[0].mxu0 %v154
    %v637 = vpop.f32.mrb[0].mxu0
    %v638 = vadd.f32 %v233, %v637
    %v639 = vpop.f32.mrb[0].mxu0
    %v640 = vadd.f32 %v237, %v639
    %v641 = vpop.f32.mrb[0].mxu0
    %v642 = vpop.f32.mrb[0].mxu0
    %643 = vdwg.mxu0
    %v644 = vmax.f32 %v597, 0.0
    %v645 = vmax.f32 %v599, 0.0
    %v646 = vmax.f32 %v638, 0.0
    %v647 = vmax.f32 %v640, 0.0
    %v648 = vpack.c.bf16 %v644, %v644
    %v649 = vpack.c.bf16 %v645, %v645
    %v650 = vpack.c.bf16 %v646, %v646
    %v651 = vpack.c.bf16 %v647, %v647
    %v652 = vld [vmem:[#allocation5] sm:$0xff]
    %v653 = vld [vmem:[#allocation5 + $0x8] sm:$0xff]
    %v654 = vld [vmem:[#allocation5 + $0x10] sm:$0xff]
    %v655 = vld [vmem:[#allocation5 + $0x18] sm:$0xff]
    %v656 = vld [vmem:[#allocation5 + $0x20] sm:$0xff]
    %v657 = vld [vmem:[#allocation5 + $0x28] sm:$0xff]
    %v658 = vld [vmem:[#allocation5 + $0x30] sm:$0xff]
    %v659 = vld [vmem:[#allocation5 + $0x38] sm:$0xff]
    %v660 = vld [vmem:[#allocation5 + $0x40] sm:$0xff]
    %v661 = vld [vmem:[#allocation5 + $0x48] sm:$0xff]
    %v662 = vld [vmem:[#allocation5 + $0x50] sm:$0xff]
    %v663 = vld [vmem:[#allocation5 + $0x58] sm:$0xff]
    %v664 = vld [vmem:[#allocation5 + $0x60] sm:$0xff]
    %v665 = vld [vmem:[#allocation5 + $0x68] sm:$0xff]
    %v666 = vld [vmem:[#allocation5 + $0x70] sm:$0xff]
    %v667 = vld [vmem:[#allocation5 + $0x78] sm:$0xff]
    %v668 = vld [vmem:[#allocation5 + $0x80] sm:$0xff]
    %v669 = vld [vmem:[#allocation5 + $0x88] sm:$0xff]
    %v670 = vld [vmem:[#allocation5 + $0x90] sm:$0xff]
    %v671 = vld [vmem:[#allocation5 + $0x98] sm:$0xff]
    %v672 = vld [vmem:[#allocation5 + $0xa0] sm:$0xff]
    %v673 = vld [vmem:[#allocation5 + $0xa8] sm:$0xff]
    %v674 = vld [vmem:[#allocation5 + $0xb0] sm:$0xff]
    %v675 = vld [vmem:[#allocation5 + $0xb8] sm:$0xff]
    %v676 = vld [vmem:[#allocation5 + $0xc0] sm:$0xff]
    %v677 = vld [vmem:[#allocation5 + $0xc8] sm:$0xff]
    %v678 = vld [vmem:[#allocation5 + $0xd0] sm:$0xff]
    %v679 = vld [vmem:[#allocation5 + $0xd8] sm:$0xff]
    %v680 = vld [vmem:[#allocation5 + $0xe0] sm:$0xff]
    %v681 = vld [vmem:[#allocation5 + $0xe8] sm:$0xff]
    %v682 = vld [vmem:[#allocation5 + $0xf0] sm:$0xff]
    %v683 = vld [vmem:[#allocation5 + $0xf8] sm:$0xff]
    %v684 = vld [vmem:[#allocation5 + $0x100] sm:$0xff]
    %v685 = vld [vmem:[#allocation5 + $0x108] sm:$0xff]
    %v686 = vld [vmem:[#allocation5 + $0x110] sm:$0xff]
    %v687 = vld [vmem:[#allocation5 + $0x118] sm:$0xff]
    %v688 = vld [vmem:[#allocation5 + $0x120] sm:$0xff]
    %v689 = vld [vmem:[#allocation5 + $0x128] sm:$0xff]
    %v690 = vld [vmem:[#allocation5 + $0x130] sm:$0xff]
    %v691 = vld [vmem:[#allocation5 + $0x138] sm:$0xff]
    %v692 = vld [vmem:[#allocation5 + $0x140] sm:$0xff]
    %v693 = vld [vmem:[#allocation5 + $0x148] sm:$0xff]
    %v694 = vld [vmem:[#allocation5 + $0x150] sm:$0xff]
    %v695 = vld [vmem:[#allocation5 + $0x158] sm:$0xff]
    %v696 = vld [vmem:[#allocation5 + $0x160] sm:$0xff]
    %v697 = vld [vmem:[#allocation5 + $0x168] sm:$0xff]
    %v698 = vld [vmem:[#allocation5 + $0x170] sm:$0xff]
    %v699 = vld [vmem:[#allocation5 + $0x178] sm:$0xff]
    %v700 = vld [vmem:[#allocation5 + $0x180] sm:$0xff]
    %v701 = vld [vmem:[#allocation5 + $0x188] sm:$0xff]
    %v702 = vld [vmem:[#allocation5 + $0x190] sm:$0xff]
    %v703 = vld [vmem:[#allocation5 + $0x198] sm:$0xff]
    %v704 = vld [vmem:[#allocation5 + $0x1a0] sm:$0xff]
    %v705 = vld [vmem:[#allocation5 + $0x1a8] sm:$0xff]
    %v706 = vld [vmem:[#allocation5 + $0x1b0] sm:$0xff]
    %v707 = vld [vmem:[#allocation5 + $0x1b8] sm:$0xff]
    %v708 = vld [vmem:[#allocation5 + $0x1c0] sm:$0xff]
    %v709 = vld [vmem:[#allocation5 + $0x1c8] sm:$0xff]
    %v710 = vld [vmem:[#allocation5 + $0x1d0] sm:$0xff]
    %v711 = vld [vmem:[#allocation5 + $0x1d8] sm:$0xff]
    %v712 = vld [vmem:[#allocation5 + $0x1e0] sm:$0xff]
    %v713 = vld [vmem:[#allocation5 + $0x1e8] sm:$0xff]
    %v714 = vld [vmem:[#allocation5 + $0x1f0] sm:$0xff]
    %v715 = vld [vmem:[#allocation5 + $0x1f8] sm:$0xff]
    %v716 = vld [vmem:[%s6] sm:$0x3]
    %v718 = vlaneseq
    %v719 = vshrl.u32 %v718, 7
    %v720 = vsub.s32 0, %v719
    %v721 = vrot.slane %v716, %v720
    %v722 = vlaneseq
    %v723 = vshrl.u32 %v722, 7
    %v724 = vsub.s32 1, %v723
    %v725 = vrot.slane %v716, %v724
    %v792 = vunpack.c.l.b16 %v652
    %v793 = vunpack.c.h.b16 %v652
    %v794 = vunpack.c.l.b16 %v653
    %v795 = vunpack.c.h.b16 %v653
    %v796 = vunpack.c.l.b16 %v654
    %v797 = vunpack.c.h.b16 %v654
    %v798 = vunpack.c.l.b16 %v655
    %v799 = vunpack.c.h.b16 %v655
    %v800 = vunpack.c.l.b16 %v656
    %v801 = vunpack.c.h.b16 %v656
    %v802 = vunpack.c.l.b16 %v657
    %v803 = vunpack.c.h.b16 %v657
    %v804 = vunpack.c.l.b16 %v658
    %v805 = vunpack.c.h.b16 %v658
    %v806 = vunpack.c.l.b16 %v659
    %v807 = vunpack.c.h.b16 %v659
    %v808 = vunpack.c.l.b16 %v660
    %v809 = vunpack.c.h.b16 %v660
    %v810 = vunpack.c.l.b16 %v661
    %v811 = vunpack.c.h.b16 %v661
    %v812 = vunpack.c.l.b16 %v662
    %v813 = vunpack.c.h.b16 %v662
    %v814 = vunpack.c.l.b16 %v663
    %v815 = vunpack.c.h.b16 %v663
    %v816 = vunpack.c.l.b16 %v664
    %v817 = vunpack.c.h.b16 %v664
    %v818 = vunpack.c.l.b16 %v665
    %v819 = vunpack.c.h.b16 %v665
    %v820 = vunpack.c.l.b16 %v666
    %v821 = vunpack.c.h.b16 %v666
    %v822 = vunpack.c.l.b16 %v667
    %v823 = vunpack.c.h.b16 %v667
    %v824 = vunpack.c.l.b16 %v668
    %v825 = vunpack.c.h.b16 %v668
    %v826 = vunpack.c.l.b16 %v669
    %v827 = vunpack.c.h.b16 %v669
    %v828 = vunpack.c.l.b16 %v670
    %v829 = vunpack.c.h.b16 %v670
    %v830 = vunpack.c.l.b16 %v671
    %v831 = vunpack.c.h.b16 %v671
    %v832 = vunpack.c.l.b16 %v672
    %v833 = vunpack.c.h.b16 %v672
    %v834 = vunpack.c.l.b16 %v673
    %v835 = vunpack.c.h.b16 %v673
    %v836 = vunpack.c.l.b16 %v674
    %v837 = vunpack.c.h.b16 %v674
    %v838 = vunpack.c.l.b16 %v675
    %v839 = vunpack.c.h.b16 %v675
    %v840 = vunpack.c.l.b16 %v676
    %v841 = vunpack.c.h.b16 %v676
    %v842 = vunpack.c.l.b16 %v677
    %v843 = vunpack.c.h.b16 %v677
    %v844 = vunpack.c.l.b16 %v678
    %v845 = vunpack.c.h.b16 %v678
    %v846 = vunpack.c.l.b16 %v679
    %v847 = vunpack.c.h.b16 %v679
    %v848 = vunpack.c.l.b16 %v680
    %v849 = vunpack.c.h.b16 %v680
    %v850 = vunpack.c.l.b16 %v681
    %v851 = vunpack.c.h.b16 %v681
    %v852 = vunpack.c.l.b16 %v682
    %v853 = vunpack.c.h.b16 %v682
    %v854 = vunpack.c.l.b16 %v683
    %v855 = vunpack.c.h.b16 %v683
    %v856 = vunpack.c.l.b16 %v684
    %v857 = vunpack.c.h.b16 %v684
    %v858 = vunpack.c.l.b16 %v685
    %v859 = vunpack.c.h.b16 %v685
    %v860 = vunpack.c.l.b16 %v686
    %v861 = vunpack.c.h.b16 %v686
    %v862 = vunpack.c.l.b16 %v687
    %v863 = vunpack.c.h.b16 %v687
    %v864 = vunpack.c.l.b16 %v688
    %v865 = vunpack.c.h.b16 %v688
    %v866 = vunpack.c.l.b16 %v689
    %v867 = vunpack.c.h.b16 %v689
    %v868 = vunpack.c.l.b16 %v690
    %v869 = vunpack.c.h.b16 %v690
    %v870 = vunpack.c.l.b16 %v691
    %v871 = vunpack.c.h.b16 %v691
    %v872 = vunpack.c.l.b16 %v692
    %v873 = vunpack.c.h.b16 %v692
    %v874 = vunpack.c.l.b16 %v693
    %v875 = vunpack.c.h.b16 %v693
    %v876 = vunpack.c.l.b16 %v694
    %v877 = vunpack.c.h.b16 %v694
    %v878 = vunpack.c.l.b16 %v695
    %v879 = vunpack.c.h.b16 %v695
    %v880 = vunpack.c.l.b16 %v696
    %v881 = vunpack.c.h.b16 %v696
    %v882 = vunpack.c.l.b16 %v697
    %v883 = vunpack.c.h.b16 %v697
    %v884 = vunpack.c.l.b16 %v698
    %v885 = vunpack.c.h.b16 %v698
    %v886 = vunpack.c.l.b16 %v699
    %v887 = vunpack.c.h.b16 %v699
    %v888 = vunpack.c.l.b16 %v700
    %v889 = vunpack.c.h.b16 %v700
    %v890 = vunpack.c.l.b16 %v701
    %v891 = vunpack.c.h.b16 %v701
    %v892 = vunpack.c.l.b16 %v702
    %v893 = vunpack.c.h.b16 %v702
    %v894 = vunpack.c.l.b16 %v703
    %v895 = vunpack.c.h.b16 %v703
    %v896 = vunpack.c.l.b16 %v704
    %v897 = vunpack.c.h.b16 %v704
    %v898 = vunpack.c.l.b16 %v705
    %v899 = vunpack.c.h.b16 %v705
    %v900 = vunpack.c.l.b16 %v706
    %v901 = vunpack.c.h.b16 %v706
    %v902 = vunpack.c.l.b16 %v707
    %v903 = vunpack.c.h.b16 %v707
    %v904 = vunpack.c.l.b16 %v708
    %v905 = vunpack.c.h.b16 %v708
    %v906 = vunpack.c.l.b16 %v709
    %v907 = vunpack.c.h.b16 %v709
    %v908 = vunpack.c.l.b16 %v710
    %v909 = vunpack.c.h.b16 %v710
    %v910 = vunpack.c.l.b16 %v711
    %v911 = vunpack.c.h.b16 %v711
    %v912 = vunpack.c.l.b16 %v712
    %v913 = vunpack.c.h.b16 %v712
    %v914 = vunpack.c.l.b16 %v713
    %v915 = vunpack.c.h.b16 %v713
    %v916 = vunpack.c.l.b16 %v714
    %v917 = vunpack.c.h.b16 %v714
    %v918 = vunpack.c.l.b16 %v715
    %v919 = vunpack.c.h.b16 %v715
    %v920 = vpack.c.b16 %v794, %v792
    %v921 = vpack.c.b16 %v795, %v793
    %v922 = vpack.c.b16 %v798, %v796
    %v923 = vpack.c.b16 %v799, %v797
    %v924 = vpack.c.b16 %v802, %v800
    %v925 = vpack.c.b16 %v803, %v801
    %v926 = vpack.c.b16 %v806, %v804
    %v927 = vpack.c.b16 %v807, %v805
    %v928 = vpack.c.b16 %v810, %v808
    %v929 = vpack.c.b16 %v811, %v809
    %v930 = vpack.c.b16 %v814, %v812
    %v931 = vpack.c.b16 %v815, %v813
    %v932 = vpack.c.b16 %v818, %v816
    %v933 = vpack.c.b16 %v819, %v817
    %v934 = vpack.c.b16 %v822, %v820
    %v935 = vpack.c.b16 %v823, %v821
    %v936 = vpack.c.b16 %v826, %v824
    %v937 = vpack.c.b16 %v827, %v825
    %v938 = vpack.c.b16 %v830, %v828
    %v939 = vpack.c.b16 %v831, %v829
    %v940 = vpack.c.b16 %v834, %v832
    %v941 = vpack.c.b16 %v835, %v833
    %v942 = vpack.c.b16 %v838, %v836
    %v943 = vpack.c.b16 %v839, %v837
    %v944 = vpack.c.b16 %v842, %v840
    %v945 = vpack.c.b16 %v843, %v841
    %v946 = vpack.c.b16 %v846, %v844
    %v947 = vpack.c.b16 %v847, %v845
    %v948 = vpack.c.b16 %v850, %v848
    %v949 = vpack.c.b16 %v851, %v849
    %v950 = vpack.c.b16 %v854, %v852
    %v951 = vpack.c.b16 %v855, %v853
    %v952 = vpack.c.b16 %v858, %v856
    %v953 = vpack.c.b16 %v859, %v857
    %v954 = vpack.c.b16 %v862, %v860
    %v955 = vpack.c.b16 %v863, %v861
    %v956 = vpack.c.b16 %v866, %v864
    %v957 = vpack.c.b16 %v867, %v865
    %v958 = vpack.c.b16 %v870, %v868
    %v959 = vpack.c.b16 %v871, %v869
    %v960 = vpack.c.b16 %v874, %v872
    %v961 = vpack.c.b16 %v875, %v873
    %v962 = vpack.c.b16 %v878, %v876
    %v963 = vpack.c.b16 %v879, %v877
    %v964 = vpack.c.b16 %v882, %v880
    %v965 = vpack.c.b16 %v883, %v881
    %v966 = vpack.c.b16 %v886, %v884
    %v967 = vpack.c.b16 %v887, %v885
    %v968 = vpack.c.b16 %v890, %v888
    %v969 = vpack.c.b16 %v891, %v889
    %v970 = vpack.c.b16 %v894, %v892
    %v971 = vpack.c.b16 %v895, %v893
    %v972 = vpack.c.b16 %v898, %v896
    %v973 = vpack.c.b16 %v899, %v897
    %v974 = vpack.c.b16 %v902, %v900
    %v975 = vpack.c.b16 %v903, %v901
    %v976 = vpack.c.b16 %v906, %v904
    %v977 = vpack.c.b16 %v907, %v905
    %v978 = vpack.c.b16 %v910, %v908
    %v979 = vpack.c.b16 %v911, %v909
    %v980 = vpack.c.b16 %v914, %v912
    %v981 = vpack.c.b16 %v915, %v913
    %v982 = vpack.c.b16 %v918, %v916
    %v983 = vpack.c.b16 %v919, %v917
    %1048 = vmatprep.subr.bf16.mxu0 %v921
    %1049 = vmatpush1.bf16.msra.mxu0 %v920
    %1050 = vmatprep.subr.bf16.mxu0 %v923
    %1051 = vmatpush1.bf16.msra.mxu0 %v922
    %1052 = vmatprep.subr.bf16.mxu0 %v925
    %1053 = vmatpush1.bf16.msra.mxu0 %v924
    %1054 = vmatprep.subr.bf16.mxu0 %v927
    %1055 = vmatpush1.bf16.msra.mxu0 %v926
    %1056 = vmatprep.subr.bf16.mxu0 %v929
    %1057 = vmatpush1.bf16.msra.mxu0 %v928
    %1058 = vmatprep.subr.bf16.mxu0 %v931
    %1059 = vmatpush1.bf16.msra.mxu0 %v930
    %1060 = vmatprep.subr.bf16.mxu0 %v933
    %1061 = vmatpush1.bf16.msra.mxu0 %v932
    %1062 = vmatprep.subr.bf16.mxu0 %v935
    %1063 = vmatpush1.bf16.msra.mxu0 %v934
    %1064 = vmatprep.subr.bf16.mxu0 %v937
    %1065 = vmatpush1.bf16.msra.mxu0 %v936
    %1066 = vmatprep.subr.bf16.mxu0 %v939
    %1067 = vmatpush1.bf16.msra.mxu0 %v938
    %1068 = vmatprep.subr.bf16.mxu0 %v941
    %1069 = vmatpush1.bf16.msra.mxu0 %v940
    %1070 = vmatprep.subr.bf16.mxu0 %v943
    %1071 = vmatpush1.bf16.msra.mxu0 %v942
    %1072 = vmatprep.subr.bf16.mxu0 %v945
    %1073 = vmatpush1.bf16.msra.mxu0 %v944
    %1074 = vmatprep.subr.bf16.mxu0 %v947
    %1075 = vmatpush1.bf16.msra.mxu0 %v946
    %1076 = vmatprep.subr.bf16.mxu0 %v949
    %1077 = vmatpush1.bf16.msra.mxu0 %v948
    %1078 = vmatprep.subr.bf16.mxu0 %v951
    %1079 = vmatpush1.bf16.msra.mxu0 %v950
    %1080 = vmatprep.mubr.bf16.mxu0 %v649
    %1081 = vmatmul.mubr.bf16.gmra.mrb[0].mxu0 %v648
    %v1082 = vpop.f32.mrb[0].mxu0
    %v1083 = vadd.f32 %v721, %v1082
    %v1084 = vpop.f32.mrb[0].mxu0
    %v1085 = vadd.f32 %v725, %v1084
    %v1086 = vpop.f32.mrb[0].mxu0
    %v1087 = vpop.f32.mrb[0].mxu0
    %1088 = vdwg.mxu0
    %1089 = vmatprep.subr.bf16.mxu0 %v953
    %1090 = vmatpush1.bf16.msra.mxu0 %v952
    %1091 = vmatprep.subr.bf16.mxu0 %v955
    %1092 = vmatpush1.bf16.msra.mxu0 %v954
    %1093 = vmatprep.subr.bf16.mxu0 %v957
    %1094 = vmatpush1.bf16.msra.mxu0 %v956
    %1095 = vmatprep.subr.bf16.mxu0 %v959
    %1096 = vmatpush1.bf16.msra.mxu0 %v958
    %1097 = vmatprep.subr.bf16.mxu0 %v961
    %1098 = vmatpush1.bf16.msra.mxu0 %v960
    %1099 = vmatprep.subr.bf16.mxu0 %v963
    %1100 = vmatpush1.bf16.msra.mxu0 %v962
    %1101 = vmatprep.subr.bf16.mxu0 %v965
    %1102 = vmatpush1.bf16.msra.mxu0 %v964
    %1103 = vmatprep.subr.bf16.mxu0 %v967
    %1104 = vmatpush1.bf16.msra.mxu0 %v966
    %1105 = vmatprep.subr.bf16.mxu0 %v969
    %1106 = vmatpush1.bf16.msra.mxu0 %v968
    %1107 = vmatprep.subr.bf16.mxu0 %v971
    %1108 = vmatpush1.bf16.msra.mxu0 %v970
    %1109 = vmatprep.subr.bf16.mxu0 %v973
    %1110 = vmatpush1.bf16.msra.mxu0 %v972
    %1111 = vmatprep.subr.bf16.mxu0 %v975
    %1112 = vmatpush1.bf16.msra.mxu0 %v974
    %1113 = vmatprep.subr.bf16.mxu0 %v977
    %1114 = vmatpush1.bf16.msra.mxu0 %v976
    %1115 = vmatprep.subr.bf16.mxu0 %v979
    %1116 = vmatpush1.bf16.msra.mxu0 %v978
    %1117 = vmatprep.subr.bf16.mxu0 %v981
    %1118 = vmatpush1.bf16.msra.mxu0 %v980
    %1119 = vmatprep.subr.bf16.mxu0 %v983
    %1120 = vmatpush1.bf16.msra.mxu0 %v982
    %1121 = vmatprep.mubr.bf16.mxu0 %v651
    %1122 = vmatmul.mubr.bf16.gmra.mrb[0].mxu0 %v650
    %v1123 = vpop.f32.mrb[0].mxu0
    %v1124 = vadd.f32 %v1083, %v1123
    %v1125 = vpop.f32.mrb[0].mxu0
    %v1126 = vadd.f32 %v1085, %v1125
    %v1127 = vpop.f32.mrb[0].mxu0
    %v1128 = vpop.f32.mrb[0].mxu0
    %1129 = vdwg.mxu0
    %v1130 = vmax.f32 %v1124, 0.0
    %v1131 = vmax.f32 %v1126, 0.0
    %v1132 = vld [vmem:[%s7] sm:$0x3]
    %v1134 = vlaneseq
    %v1135 = vshrl.u32 %v1134, 7
    %v1136 = vsub.s32 0, %v1135
    %v1137 = vrot.slane %v1132, %v1136
    %v1138 = vlaneseq
    %v1139 = vshrl.u32 %v1138, 7
    %v1140 = vsub.s32 1, %v1139
    %v1141 = vrot.slane %v1132, %v1140
    %v1144 = vmul.f32 %v1130, %v1137
    %v1145 = vmul.f32 %v1131, %v1141
    %v1146 = vadd.f32 %v1144, %v1145
    %1147 = vadd.xlane.f32.xlu0 %v1146
    %v1148 = vpop.xlane.xlu0 %1147
    %vm1149 = vcmp.gt.f32.partialorder %v1130, 0.0
    %vm1150 = vcmp.gt.f32.partialorder %v1131, 0.0
    %v1151 = vsel %vm1149, 1, 0
    %v1152 = vsel %vm1150, 1, 0
    %v1153 = vcvt.s32.f32 %v1151
    %v1154 = vcvt.s32.f32 %v1152
    %v1155 = vpack.c.bf16 %v1153, %v1153
    %v1156 = vpack.c.bf16 %v1154, %v1154
    %v1157 = vld [vmem:[#allocation7] sm:$0xff]
    %v1158 = vld [vmem:[#allocation7 + $0x8] sm:$0xff]
    %v1159 = vld [vmem:[#allocation7 + $0x10] sm:$0xff]
    %v1160 = vld [vmem:[#allocation7 + $0x18] sm:$0xff]
    %v1161 = vld [vmem:[#allocation7 + $0x20] sm:$0xff]
    %v1162 = vld [vmem:[#allocation7 + $0x28] sm:$0xff]
    %v1163 = vld [vmem:[#allocation7 + $0x30] sm:$0xff]
    %v1164 = vld [vmem:[#allocation7 + $0x38] sm:$0xff]
    %v1165 = vld [vmem:[#allocation7 + $0x40] sm:$0xff]
    %v1166 = vld [vmem:[#allocation7 + $0x48] sm:$0xff]
    %v1167 = vld [vmem:[#allocation7 + $0x50] sm:$0xff]
    %v1168 = vld [vmem:[#allocation7 + $0x58] sm:$0xff]
    %v1169 = vld [vmem:[#allocation7 + $0x60] sm:$0xff]
    %v1170 = vld [vmem:[#allocation7 + $0x68] sm:$0xff]
    %v1171 = vld [vmem:[#allocation7 + $0x70] sm:$0xff]
    %v1172 = vld [vmem:[#allocation7 + $0x78] sm:$0xff]
    %v1173 = vld [vmem:[#allocation7 + $0x80] sm:$0xff]
    %v1174 = vld [vmem:[#allocation7 + $0x88] sm:$0xff]
    %v1175 = vld [vmem:[#allocation7 + $0x90] sm:$0xff]
    %v1176 = vld [vmem:[#allocation7 + $0x98] sm:$0xff]
    %v1177 = vld [vmem:[#allocation7 + $0xa0] sm:$0xff]
    %v1178 = vld [vmem:[#allocation7 + $0xa8] sm:$0xff]
    %v1179 = vld [vmem:[#allocation7 + $0xb0] sm:$0xff]
    %v1180 = vld [vmem:[#allocation7 + $0xb8] sm:$0xff]
    %v1181 = vld [vmem:[#allocation7 + $0xc0] sm:$0xff]
    %v1182 = vld [vmem:[#allocation7 + $0xc8] sm:$0xff]
    %v1183 = vld [vmem:[#allocation7 + $0xd0] sm:$0xff]
    %v1184 = vld [vmem:[#allocation7 + $0xd8] sm:$0xff]
    %v1185 = vld [vmem:[#allocation7 + $0xe0] sm:$0xff]
    %v1186 = vld [vmem:[#allocation7 + $0xe8] sm:$0xff]
    %v1187 = vld [vmem:[#allocation7 + $0xf0] sm:$0xff]
    %v1188 = vld [vmem:[#allocation7 + $0xf8] sm:$0xff]
    %v1189 = vld [vmem:[#allocation7 + $0x100] sm:$0xff]
    %v1190 = vld [vmem:[#allocation7 + $0x108] sm:$0xff]
    %v1191 = vld [vmem:[#allocation7 + $0x110] sm:$0xff]
    %v1192 = vld [vmem:[#allocation7 + $0x118] sm:$0xff]
    %v1193 = vld [vmem:[#allocation7 + $0x120] sm:$0xff]
    %v1194 = vld [vmem:[#allocation7 + $0x128] sm:$0xff]
    %v1195 = vld [vmem:[#allocation7 + $0x130] sm:$0xff]
    %v1196 = vld [vmem:[#allocation7 + $0x138] sm:$0xff]
    %v1197 = vld [vmem:[#allocation7 + $0x140] sm:$0xff]
    %v1198 = vld [vmem:[#allocation7 + $0x148] sm:$0xff]
    %v1199 = vld [vmem:[#allocation7 + $0x150] sm:$0xff]
    %v1200 = vld [vmem:[#allocation7 + $0x158] sm:$0xff]
    %v1201 = vld [vmem:[#allocation7 + $0x160] sm:$0xff]
    %v1202 = vld [vmem:[#allocation7 + $0x168] sm:$0xff]
    %v1203 = vld [vmem:[#allocation7 + $0x170] sm:$0xff]
    %v1204 = vld [vmem:[#allocation7 + $0x178] sm:$0xff]
    %v1205 = vld [vmem:[#allocation7 + $0x180] sm:$0xff]
    %v1206 = vld [vmem:[#allocation7 + $0x188] sm:$0xff]
    %v1207 = vld [vmem:[#allocation7 + $0x190] sm:$0xff]
    %v1208 = vld [vmem:[#allocation7 + $0x198] sm:$0xff]
    %v1209 = vld [vmem:[#allocation7 + $0x1a0] sm:$0xff]
    %v1210 = vld [vmem:[#allocation7 + $0x1a8] sm:$0xff]
    %v1211 = vld [vmem:[#allocation7 + $0x1b0] sm:$0xff]
    %v1212 = vld [vmem:[#allocation7 + $0x1b8] sm:$0xff]
    %v1213 = vld [vmem:[#allocation7 + $0x1c0] sm:$0xff]
    %v1214 = vld [vmem:[#allocation7 + $0x1c8] sm:$0xff]
    %v1215 = vld [vmem:[#allocation7 + $0x1d0] sm:$0xff]
    %v1216 = vld [vmem:[#allocation7 + $0x1d8] sm:$0xff]
    %v1217 = vld [vmem:[#allocation7 + $0x1e0] sm:$0xff]
    %v1218 = vld [vmem:[#allocation7 + $0x1e8] sm:$0xff]
    %v1219 = vld [vmem:[#allocation7 + $0x1f0] sm:$0xff]
    %v1220 = vld [vmem:[#allocation7 + $0x1f8] sm:$0xff]
    %v1221 = vld [vmem:[%s9] sm:$0xf]
    %v1223 = vlaneseq
    %v1224 = vshrl.u32 %v1223, 7
    %v1225 = vsub.s32 0, %v1224
    %v1226 = vrot.slane %v1221, %v1225
    %v1227 = vlaneseq
    %v1228 = vshrl.u32 %v1227, 7
    %v1229 = vsub.s32 1, %v1228
    %v1230 = vrot.slane %v1221, %v1229
    %v1231 = vlaneseq
    %v1232 = vshrl.u32 %v1231, 7
    %v1233 = vsub.s32 2, %v1232
    %v1234 = vrot.slane %v1221, %v1233
    %v1235 = vlaneseq
    %v1236 = vshrl.u32 %v1235, 7
    %v1237 = vsub.s32 3, %v1236
    %v1238 = vrot.slane %v1221, %v1237
    %v1307 = vunpack.c.l.b16 %v1157
    %v1308 = vunpack.c.h.b16 %v1157
    %v1309 = vunpack.c.l.b16 %v1158
    %v1310 = vunpack.c.h.b16 %v1158
    %v1311 = vunpack.c.l.b16 %v1159
    %v1312 = vunpack.c.h.b16 %v1159
    %v1313 = vunpack.c.l.b16 %v1160
    %v1314 = vunpack.c.h.b16 %v1160
    %v1315 = vunpack.c.l.b16 %v1161
    %v1316 = vunpack.c.h.b16 %v1161
    %v1317 = vunpack.c.l.b16 %v1162
    %v1318 = vunpack.c.h.b16 %v1162
    %v1319 = vunpack.c.l.b16 %v1163
    %v1320 = vunpack.c.h.b16 %v1163
    %v1321 = vunpack.c.l.b16 %v1164
    %v1322 = vunpack.c.h.b16 %v1164
    %v1323 = vunpack.c.l.b16 %v1165
    %v1324 = vunpack.c.h.b16 %v1165
    %v1325 = vunpack.c.l.b16 %v1166
    %v1326 = vunpack.c.h.b16 %v1166
    %v1327 = vunpack.c.l.b16 %v1167
    %v1328 = vunpack.c.h.b16 %v1167
    %v1329 = vunpack.c.l.b16 %v1168
    %v1330 = vunpack.c.h.b16 %v1168
    %v1331 = vunpack.c.l.b16 %v1169
    %v1332 = vunpack.c.h.b16 %v1169
    %v1333 = vunpack.c.l.b16 %v1170
    %v1334 = vunpack.c.h.b16 %v1170
    %v1335 = vunpack.c.l.b16 %v1171
    %v1336 = vunpack.c.h.b16 %v1171
    %v1337 = vunpack.c.l.b16 %v1172
    %v1338 = vunpack.c.h.b16 %v1172
    %v1339 = vunpack.c.l.b16 %v1173
    %v1340 = vunpack.c.h.b16 %v1173
    %v1341 = vunpack.c.l.b16 %v1174
    %v1342 = vunpack.c.h.b16 %v1174
    %v1343 = vunpack.c.l.b16 %v1175
    %v1344 = vunpack.c.h.b16 %v1175
    %v1345 = vunpack.c.l.b16 %v1176
    %v1346 = vunpack.c.h.b16 %v1176
    %v1347 = vunpack.c.l.b16 %v1177
    %v1348 = vunpack.c.h.b16 %v1177
    %v1349 = vunpack.c.l.b16 %v1178
    %v1350 = vunpack.c.h.b16 %v1178
    %v1351 = vunpack.c.l.b16 %v1179
    %v1352 = vunpack.c.h.b16 %v1179
    %v1353 = vunpack.c.l.b16 %v1180
    %v1354 = vunpack.c.h.b16 %v1180
    %v1355 = vunpack.c.l.b16 %v1181
    %v1356 = vunpack.c.h.b16 %v1181
    %v1357 = vunpack.c.l.b16 %v1182
    %v1358 = vunpack.c.h.b16 %v1182
    %v1359 = vunpack.c.l.b16 %v1183
    %v1360 = vunpack.c.h.b16 %v1183
    %v1361 = vunpack.c.l.b16 %v1184
    %v1362 = vunpack.c.h.b16 %v1184
    %v1363 = vunpack.c.l.b16 %v1185
    %v1364 = vunpack.c.h.b16 %v1185
    %v1365 = vunpack.c.l.b16 %v1186
    %v1366 = vunpack.c.h.b16 %v1186
    %v1367 = vunpack.c.l.b16 %v1187
    %v1368 = vunpack.c.h.b16 %v1187
    %v1369 = vunpack.c.l.b16 %v1188
    %v1370 = vunpack.c.h.b16 %v1188
    %v1371 = vunpack.c.l.b16 %v1189
    %v1372 = vunpack.c.h.b16 %v1189
    %v1373 = vunpack.c.l.b16 %v1190
    %v1374 = vunpack.c.h.b16 %v1190
    %v1375 = vunpack.c.l.b16 %v1191
    %v1376 = vunpack.c.h.b16 %v1191
    %v1377 = vunpack.c.l.b16 %v1192
    %v1378 = vunpack.c.h.b16 %v1192
    %v1379 = vunpack.c.l.b16 %v1193
    %v1380 = vunpack.c.h.b16 %v1193
    %v1381 = vunpack.c.l.b16 %v1194
    %v1382 = vunpack.c.h.b16 %v1194
    %v1383 = vunpack.c.l.b16 %v1195
    %v1384 = vunpack.c.h.b16 %v1195
    %v1385 = vunpack.c.l.b16 %v1196
    %v1386 = vunpack.c.h.b16 %v1196
    %v1387 = vunpack.c.l.b16 %v1197
    %v1388 = vunpack.c.h.b16 %v1197
    %v1389 = vunpack.c.l.b16 %v1198
    %v1390 = vunpack.c.h.b16 %v1198
    %v1391 = vunpack.c.l.b16 %v1199
    %v1392 = vunpack.c.h.b16 %v1199
    %v1393 = vunpack.c.l.b16 %v1200
    %v1394 = vunpack.c.h.b16 %v1200
    %v1395 = vunpack.c.l.b16 %v1201
    %v1396 = vunpack.c.h.b16 %v1201
    %v1397 = vunpack.c.l.b16 %v1202
    %v1398 = vunpack.c.h.b16 %v1202
    %v1399 = vunpack.c.l.b16 %v1203
    %v1400 = vunpack.c.h.b16 %v1203
    %v1401 = vunpack.c.l.b16 %v1204
    %v1402 = vunpack.c.h.b16 %v1204
    %v1403 = vunpack.c.l.b16 %v1205
    %v1404 = vunpack.c.h.b16 %v1205
    %v1405 = vunpack.c.l.b16 %v1206
    %v1406 = vunpack.c.h.b16 %v1206
    %v1407 = vunpack.c.l.b16 %v1207
    %v1408 = vunpack.c.h.b16 %v1207
    %v1409 = vunpack.c.l.b16 %v1208
    %v1410 = vunpack.c.h.b16 %v1208
    %v1411 = vunpack.c.l.b16 %v1209
    %v1412 = vunpack.c.h.b16 %v1209
    %v1413 = vunpack.c.l.b16 %v1210
    %v1414 = vunpack.c.h.b16 %v1210
    %v1415 = vunpack.c.l.b16 %v1211
    %v1416 = vunpack.c.h.b16 %v1211
    %v1417 = vunpack.c.l.b16 %v1212
    %v1418 = vunpack.c.h.b16 %v1212
    %v1419 = vunpack.c.l.b16 %v1213
    %v1420 = vunpack.c.h.b16 %v1213
    %v1421 = vunpack.c.l.b16 %v1214
    %v1422 = vunpack.c.h.b16 %v1214
    %v1423 = vunpack.c.l.b16 %v1215
    %v1424 = vunpack.c.h.b16 %v1215
    %v1425 = vunpack.c.l.b16 %v1216
    %v1426 = vunpack.c.h.b16 %v1216
    %v1427 = vunpack.c.l.b16 %v1217
    %v1428 = vunpack.c.h.b16 %v1217
    %v1429 = vunpack.c.l.b16 %v1218
    %v1430 = vunpack.c.h.b16 %v1218
    %v1431 = vunpack.c.l.b16 %v1219
    %v1432 = vunpack.c.h.b16 %v1219
    %v1433 = vunpack.c.l.b16 %v1220
    %v1434 = vunpack.c.h.b16 %v1220
    %v1435 = vpack.c.b16 %v1311, %v1307
    %v1436 = vpack.c.b16 %v1312, %v1308
    %v1437 = vpack.c.b16 %v1313, %v1309
    %v1438 = vpack.c.b16 %v1314, %v1310
    %v1439 = vpack.c.b16 %v1319, %v1315
    %v1440 = vpack.c.b16 %v1320, %v1316
    %v1441 = vpack.c.b16 %v1321, %v1317
    %v1442 = vpack.c.b16 %v1322, %v1318
    %v1443 = vpack.c.b16 %v1327, %v1323
    %v1444 = vpack.c.b16 %v1328, %v1324
    %v1445 = vpack.c.b16 %v1329, %v1325
    %v1446 = vpack.c.b16 %v1330, %v1326
    %v1447 = vpack.c.b16 %v1335, %v1331
    %v1448 = vpack.c.b16 %v1336, %v1332
    %v1449 = vpack.c.b16 %v1337, %v1333
    %v1450 = vpack.c.b16 %v1338, %v1334
    %v1451 = vpack.c.b16 %v1343, %v1339
    %v1452 = vpack.c.b16 %v1344, %v1340
    %v1453 = vpack.c.b16 %v1345, %v1341
    %v1454 = vpack.c.b16 %v1346, %v1342
    %v1455 = vpack.c.b16 %v1351, %v1347
    %v1456 = vpack.c.b16 %v1352, %v1348
    %v1457 = vpack.c.b16 %v1353, %v1349
    %v1458 = vpack.c.b16 %v1354, %v1350
    %v1459 = vpack.c.b16 %v1359, %v1355
    %v1460 = vpack.c.b16 %v1360, %v1356
    %v1461 = vpack.c.b16 %v1361, %v1357
    %v1462 = vpack.c.b16 %v1362, %v1358
    %v1463 = vpack.c.b16 %v1367, %v1363
    %v1464 = vpack.c.b16 %v1368, %v1364
    %v1465 = vpack.c.b16 %v1369, %v1365
    %v1466 = vpack.c.b16 %v1370, %v1366
    %v1467 = vpack.c.b16 %v1375, %v1371
    %v1468 = vpack.c.b16 %v1376, %v1372
    %v1469 = vpack.c.b16 %v1377, %v1373
    %v1470 = vpack.c.b16 %v1378, %v1374
    %v1471 = vpack.c.b16 %v1383, %v1379
    %v1472 = vpack.c.b16 %v1384, %v1380
    %v1473 = vpack.c.b16 %v1385, %v1381
    %v1474 = vpack.c.b16 %v1386, %v1382
    %v1475 = vpack.c.b16 %v1391, %v1387
    %v1476 = vpack.c.b16 %v1392, %v1388
    %v1477 = vpack.c.b16 %v1393, %v1389
    %v1478 = vpack.c.b16 %v1394, %v1390
    %v1479 = vpack.c.b16 %v1399, %v1395
    %v1480 = vpack.c.b16 %v1400, %v1396
    %v1481 = vpack.c.b16 %v1401, %v1397
    %v1482 = vpack.c.b16 %v1402, %v1398
    %v1483 = vpack.c.b16 %v1407, %v1403
    %v1484 = vpack.c.b16 %v1408, %v1404
    %v1485 = vpack.c.b16 %v1409, %v1405
    %v1486 = vpack.c.b16 %v1410, %v1406
    %v1487 = vpack.c.b16 %v1415, %v1411
    %v1488 = vpack.c.b16 %v1416, %v1412
    %v1489 = vpack.c.b16 %v1417, %v1413
    %v1490 = vpack.c.b16 %v1418, %v1414
    %v1491 = vpack.c.b16 %v1423, %v1419
    %v1492 = vpack.c.b16 %v1424, %v1420
    %v1493 = vpack.c.b16 %v1425, %v1421
    %v1494 = vpack.c.b16 %v1426, %v1422
    %v1495 = vpack.c.b16 %v1431, %v1427
    %v1496 = vpack.c.b16 %v1432, %v1428
    %v1497 = vpack.c.b16 %v1433, %v1429
    %v1498 = vpack.c.b16 %v1434, %v1430
    %1563 = vmatprep.subr.bf16.mxu0 %v1436
    %1564 = vmatpush1.bf16.msra.mxu0 %v1435
    %1565 = vmatprep.subr.bf16.mxu0 %v1440
    %1566 = vmatpush1.bf16.msra.mxu0 %v1439
    %1567 = vmatprep.subr.bf16.mxu0 %v1444
    %1568 = vmatpush1.bf16.msra.mxu0 %v1443
    %1569 = vmatprep.subr.bf16.mxu0 %v1448
    %1570 = vmatpush1.bf16.msra.mxu0 %v1447
    %1571 = vmatprep.subr.bf16.mxu0 %v1452
    %1572 = vmatpush1.bf16.msra.mxu0 %v1451
    %1573 = vmatprep.subr.bf16.mxu0 %v1456
    %1574 = vmatpush1.bf16.msra.mxu0 %v1455
    %1575 = vmatprep.subr.bf16.mxu0 %v1460
    %1576 = vmatpush1.bf16.msra.mxu0 %v1459
    %1577 = vmatprep.subr.bf16.mxu0 %v1464
    %1578 = vmatpush1.bf16.msra.mxu0 %v1463
    %1579 = vmatprep.subr.bf16.mxu0 %v1468
    %1580 = vmatpush1.bf16.msra.mxu0 %v1467
    %1581 = vmatprep.subr.bf16.mxu0 %v1472
    %1582 = vmatpush1.bf16.msra.mxu0 %v1471
    %1583 = vmatprep.subr.bf16.mxu0 %v1476
    %1584 = vmatpush1.bf16.msra.mxu0 %v1475
    %1585 = vmatprep.subr.bf16.mxu0 %v1480
    %1586 = vmatpush1.bf16.msra.mxu0 %v1479
    %1587 = vmatprep.subr.bf16.mxu0 %v1484
    %1588 = vmatpush1.bf16.msra.mxu0 %v1483
    %1589 = vmatprep.subr.bf16.mxu0 %v1488
    %1590 = vmatpush1.bf16.msra.mxu0 %v1487
    %1591 = vmatprep.subr.bf16.mxu0 %v1492
    %1592 = vmatpush1.bf16.msra.mxu0 %v1491
    %1593 = vmatprep.subr.bf16.mxu0 %v1496
    %1594 = vmatpush1.bf16.msra.mxu0 %v1495
    %1595 = vmatprep.mubr.bf16.mxu0 %v1156
    %1596 = vmatmul.mubr.bf16.gmra.mrb[0].mxu0 %v1155
    %v1597 = vpop.f32.mrb[0].mxu0
    %v1598 = vadd.f32 %v1226, %v1597
    %v1599 = vpop.f32.mrb[0].mxu0
    %v1600 = vadd.f32 %v1230, %v1599
    %v1601 = vpop.f32.mrb[0].mxu0
    %v1602 = vpop.f32.mrb[0].mxu0
    %1603 = vdwg.mxu0
    %1604 = vmatprep.subr.bf16.mxu0 %v1438
    %1605 = vmatpush1.bf16.msra.mxu0 %v1437
    %1606 = vmatprep.subr.bf16.mxu0 %v1442
    %1607 = vmatpush1.bf16.msra.mxu0 %v1441
    %1608 = vmatprep.subr.bf16.mxu0 %v1446
    %1609 = vmatpush1.bf16.msra.mxu0 %v1445
    %1610 = vmatprep.subr.bf16.mxu0 %v1450
    %1611 = vmatpush1.bf16.msra.mxu0 %v1449
    %1612 = vmatprep.subr.bf16.mxu0 %v1454
    %1613 = vmatpush1.bf16.msra.mxu0 %v1453
    %1614 = vmatprep.subr.bf16.mxu0 %v1458
    %1615 = vmatpush1.bf16.msra.mxu0 %v1457
    %1616 = vmatprep.subr.bf16.mxu0 %v1462
    %1617 = vmatpush1.bf16.msra.mxu0 %v1461
    %1618 = vmatprep.subr.bf16.mxu0 %v1466
    %1619 = vmatpush1.bf16.msra.mxu0 %v1465
    %1620 = vmatprep.subr.bf16.mxu0 %v1470
    %1621 = vmatpush1.bf16.msra.mxu0 %v1469
    %1622 = vmatprep.subr.bf16.mxu0 %v1474
    %1623 = vmatpush1.bf16.msra.mxu0 %v1473
    %1624 = vmatprep.subr.bf16.mxu0 %v1478
    %1625 = vmatpush1.bf16.msra.mxu0 %v1477
    %1626 = vmatprep.subr.bf16.mxu0 %v1482
    %1627 = vmatpush1.bf16.msra.mxu0 %v1481
    %1628 = vmatprep.subr.bf16.mxu0 %v1486
    %1629 = vmatpush1.bf16.msra.mxu0 %v1485
    %1630 = vmatprep.subr.bf16.mxu0 %v1490
    %1631 = vmatpush1.bf16.msra.mxu0 %v1489
    %1632 = vmatprep.subr.bf16.mxu0 %v1494
    %1633 = vmatpush1.bf16.msra.mxu0 %v1493
    %1634 = vmatprep.subr.bf16.mxu0 %v1498
    %1635 = vmatpush1.bf16.msra.mxu0 %v1497
    %1636 = vmatprep.mubr.bf16.mxu0 %v1156
    %1637 = vmatmul.mubr.bf16.gmra.mrb[0].mxu0 %v1155
    %v1638 = vpop.f32.mrb[0].mxu0
    %v1639 = vadd.f32 %v1234, %v1638
    %v1640 = vpop.f32.mrb[0].mxu0
    %v1641 = vadd.f32 %v1238, %v1640
    %v1642 = vpop.f32.mrb[0].mxu0
    %v1643 = vpop.f32.mrb[0].mxu0
    %1644 = vdwg.mxu0
    %v1645 = vpack.c.bf16 %v1598, %v1598
    %v1646 = vpack.c.bf16 %v1600, %v1600
    %v1647 = vpack.c.bf16 %v1639, %v1639
    %v1648 = vpack.c.bf16 %v1641, %v1641
    %v1649 = vtanh.bf16.pop %v1645
    %v1650 = vtanh.bf16.pop %v1646
    %v1651 = vtanh.bf16.pop %v1647
    %v1652 = vtanh.bf16.pop %v1648
    %v1653 = vld [vmem:[%s10] sm:$0xf]
    %v1654 = vunpack.c.l.bf16 %v1649
    %v1655 = vunpack.c.l.bf16 %v1650
    %v1656 = vunpack.c.l.bf16 %v1651
    %v1657 = vunpack.c.l.bf16 %v1652
    %v1659 = vlaneseq
    %v1660 = vshrl.u32 %v1659, 7
    %v1661 = vsub.s32 0, %v1660
    %v1662 = vrot.slane %v1653, %v1661
    %v1663 = vlaneseq
    %v1664 = vshrl.u32 %v1663, 7
    %v1665 = vsub.s32 1, %v1664
    %v1666 = vrot.slane %v1653, %v1665
    %v1667 = vlaneseq
    %v1668 = vshrl.u32 %v1667, 7
    %v1669 = vsub.s32 2, %v1668
    %v1670 = vrot.slane %v1653, %v1669
    %v1671 = vlaneseq
    %v1672 = vshrl.u32 %v1671, 7
    %v1673 = vsub.s32 3, %v1672
    %v1674 = vrot.slane %v1653, %v1673
    %v1679 = vmul.f32 %v1654, %v1662
    %v1680 = vmul.f32 %v1655, %v1666
    %v1681 = vmul.f32 %v1656, %v1670
    %v1682 = vmul.f32 %v1657, %v1674
    %v1683 = vadd.f32 %v1679, %v1680
    %v1684 = vadd.f32 %v1683, %v1681
    %v1685 = vadd.f32 %v1684, %v1682
    %1686 = vadd.xlane.f32.xlu0 %v1685
    %v1687 = vpop.xlane.xlu0 %1686
    %v1688 = vld [vmem:[#allocation2] sm:$0x1]
    %v1690 = vlaneseq
    %v1691 = vshrl.u32 %v1690, 7
    %v1692 = vsub.s32 0, %v1691
    %v1693 = vrot.slane %v1688, %v1692
    %v1695 = vadd.f32 %v1687, %v1693
    %v1696 = vadd.f32 %v1148, %v1695
    %vm1697 = vcmask 7168
    %1698 = vst.msk [vmem:[%s12] sm:$0xff] %vm1697, %v1696
    // Predicated region
    $region62: #{tpu_custom_call.1} parent=1 // pred_check
      _
    $region63: #{tpu_custom_call.1} parent=1 // pred_check_branch
      %1700 = sbr.rel (0) target = $region65
    $region64: #{tpu_custom_call.1} parent=1 // pred_region
      _
    $region65: #{tpu_custom_call.1} parent=1 // pred_fallthru
      _
    // Predicated region
    $region66: #{tpu_custom_call.1} parent=1 // pred_check
      _
    $region67: #{tpu_custom_call.1} parent=1 // pred_check_branch
      %1702 = sbr.rel (0) target = $region69
    $region68: #{tpu_custom_call.1} parent=1 // pred_region
      _
    $region69: #{tpu_custom_call.1} parent=1 // pred_fallthru
      _
    %1703 = vsyncpa [#allocation4], 1
    %1704 = vsyncpa [#allocation6], 1

</llo_original>
